<compile_context>
chip_gen: v5e
topology: v5e:2x2
jax: 0.10.0
libtpu: 0.0.40
codegen_flags: <defaults>
</compile_context>

<pallas_src>
import functools

import jax
import jax.numpy as jnp
from jax.experimental import pallas as pl
from jax.experimental.pallas import tpu as pltpu


def _conv_bn_relu_kernel(x_ref, w_ref, s_ref, b_ref, o_ref, col_ref,
                         *, Ht, W, K, Cin):
    # x_ref  : (1, Hp, Wp, Cin)  padded NHWC image for batch n (bf16), resident
    # w_ref  : (K*K*Cin, Ct)     flattened HWIO weights for this Cout tile (bf16)
    # s_ref  : (1, Ct)           folded BN scale  (f32)
    # b_ref  : (1, Ct)           folded BN shift  (f32)
    # o_ref  : (1, Ht, W, Ct)    output tile (lane-dense: Ct multiple of 128)
    # col_ref: (Ht, W, K*K*Cin)  VMEM scratch: im2col patch matrix (bf16)
    t = pl.program_id(1)   # H-tile index
    c = pl.program_id(2)   # Cout-tile index

    # Build the im2col LHS once per (n, H-tile); reuse it for every Cout tile.
    @pl.when(c == 0)
    def _build_cols():
        h0 = pl.multiple_of(t * Ht, Ht)
        for kh in range(K):
            for kw in range(K):
                kk = kh * K + kw
                col_ref[:, :, kk * Cin:(kk + 1) * Cin] = (
                    x_ref[0, pl.ds(h0 + kh, Ht), kw:kw + W, :])

    # One big MXU matmul: contraction depth K*K*Cin, f32 accumulation.
    acc = jax.lax.dot_general(
        col_ref[...], w_ref[...],
        dimension_numbers=(((2,), (0,)), ((), ())),
        preferred_element_type=jnp.float32)                   # (Ht, W, Ct)

    # Fused BN (folded scale/shift) + ReLU epilogue in f32.
    y = acc * s_ref[0][None, None, :] + b_ref[0][None, None, :]
    y = jnp.maximum(y, 0.0)
    o_ref[0] = y.astype(o_ref.dtype)


def conv_bn_relu(x_nchw, w_oihw, gamma, beta, running_mean, running_var,
                 eps=1e-5, *, h_tile=None, cout_tile=128,
                 compute_dtype=jnp.bfloat16):
    """Fused Conv2d(k, s=1, p=(k-1)//2, no bias) + BatchNorm2d(eval) + ReLU."""
    N, Cin, H, W = x_nchw.shape
    Cout, Cin_w, K, K2 = w_oihw.shape
    assert Cin == Cin_w and K == K2
    assert K % 2 == 1, "padding=(K-1)//2 assumes odd kernel size"
    pad = (K - 1) // 2
    KKC = K * K * Cin

    LANE = 128
    Ct = cout_tile
    assert Ct % LANE == 0
    Cp = ((Cout + Ct - 1) // Ct) * Ct          # Cout padded -> lane-dense stores

    if h_tile is None:
        h_tile = 8 if H % 8 == 0 else H        # keep per-step VMEM small (v7x)
    Ht = h_tile
    assert H % Ht == 0

    # ---- wrapper glue (plain JAX; fuses under jit) -------------------------
    x_nhwc = jnp.transpose(x_nchw, (0, 2, 3, 1)).astype(compute_dtype)
    x_pad = jnp.pad(x_nhwc, ((0, 0), (pad, pad), (pad, pad), (0, 0)))
    Hp, Wp = H + 2 * pad, W + 2 * pad

    # OIHW -> HWIO -> (K*K*Cin, Cout), zero-padded to Cp output channels.
    w_flat = jnp.transpose(w_oihw, (2, 3, 1, 0)).reshape(KKC, Cout)
    w_flat = jnp.pad(w_flat, ((0, 0), (0, Cp - Cout))).astype(compute_dtype)

    # Fold eval-mode BN into per-channel scale/shift (f32 epilogue params).
    scale = (gamma / jnp.sqrt(running_var + eps)).astype(jnp.float32)
    shift = (beta - running_mean * scale).astype(jnp.float32)
    scale_p = jnp.pad(scale, (0, Cp - Cout)).reshape(1, Cp)
    shift_p = jnp.pad(shift, (0, Cp - Cout)).reshape(1, Cp)

    kernel = functools.partial(_conv_bn_relu_kernel, Ht=Ht, W=W, K=K, Cin=Cin)

    out_nhwc = pl.pallas_call(
        kernel,
        out_shape=jax.ShapeDtypeStruct((N, H, W, Cp), x_nchw.dtype),
        grid_spec=pltpu.PrefetchScalarGridSpec(
            num_scalar_prefetch=0,
            grid=(N, H // Ht, Cp // Ct),
            in_specs=[
                # Whole padded image per batch element, resident across H/C tiles.
                pl.BlockSpec((1, Hp, Wp, Cin), lambda n, t, c: (n, 0, 0, 0)),
                pl.BlockSpec((KKC, Ct), lambda n, t, c: (0, c)),
                pl.BlockSpec((1, Ct), lambda n, t, c: (0, c)),
                pl.BlockSpec((1, Ct), lambda n, t, c: (0, c)),
            ],
            out_specs=pl.BlockSpec((1, Ht, W, Ct),
                                   lambda n, t, c: (n, t, 0, c)),
            scratch_shapes=[pltpu.VMEM((Ht, W, KKC), compute_dtype)],
        ),
        compiler_params=pltpu.CompilerParams(
            dimension_semantics=("parallel", "parallel", "arbitrary"),
            vmem_limit_bytes=64 * 1024 * 1024,
        ),
    )(x_pad, w_flat, scale_p, shift_p)

    out = out_nhwc[..., :Cout]                     # drop Cout padding
    return jnp.transpose(out, (0, 3, 1, 2))        # NHWC -> NCHW


def _reference(x_nchw, w_oihw, gamma, beta, running_mean, running_var,
               eps=1e-5):
    y = jax.lax.conv_general_dilated(
        x_nchw.astype(jnp.float32), w_oihw.astype(jnp.float32),
        window_strides=(1, 1), padding="SAME",
        dimension_numbers=("NCHW", "OIHW", "NCHW"))
    scale = gamma / jnp.sqrt(running_var + eps)
    bias = beta - running_mean * scale
    y = y * scale[None, :, None, None] + bias[None, :, None, None]
    return jnp.maximum(y, 0.0)


if __name__ == "__main__":
    key = jax.random.PRNGKey(0)
    k_x, k_w, k_g, k_b = jax.random.split(key, 4)

    N, Cin, H, W = 2, 4, 16, 16
    Cout, K = 8, 3

    x = jax.random.normal(k_x, (N, Cin, H, W), dtype=jnp.float32)
    # Conv2d weight (OIHW); bias disabled because norm_layer is used.
    w = jax.random.normal(k_w, (Cout, Cin, K, K), dtype=jnp.float32) * 0.1
    # BatchNorm2d params (affine=True) + fresh running stats (eval mode).
    gamma = jax.random.normal(k_g, (Cout,), dtype=jnp.float32) * 0.1 + 1.0
    beta = jax.random.normal(k_b, (Cout,), dtype=jnp.float32) * 0.1
    running_mean = jnp.zeros((Cout,), jnp.float32)
    running_var = jnp.ones((Cout,), jnp.float32)

    fn = jax.jit(conv_bn_relu)
    out = jax.block_until_ready(fn(x, w, gamma, beta, running_mean, running_var))

    ref = _reference(x, w, gamma, beta, running_mean, running_var)
    assert out.shape == (N, Cout, H, W)
    # bf16 MXU inputs (f32 accumulation) -> tolerance loosened vs f32 reference.
    assert jnp.allclose(out, ref, atol=5e-2, rtol=5e-2), float(
        jnp.max(jnp.abs(out - ref)))

    print("KERNEL_OK")
</pallas_src>

<mosaic_0001>
module attributes {stable_mosaic.version = 11 : i64} {
  func.func @_conv_bn_relu_kernel(%arg0: i32, %arg1: i32, %arg2: i32, %arg3: memref<1x18x18x4xbf16, #tpu.memory_space<vmem>>, %arg4: memref<36x128xbf16, #tpu.memory_space<vmem>>, %arg5: memref<1x128xf32, #tpu.memory_space<vmem>>, %arg6: memref<1x128xf32, #tpu.memory_space<vmem>>, %arg7: memref<1x8x16x128xf32, #tpu.memory_space<vmem>>, %arg8: memref<8x16x36xbf16, #tpu.memory_space<vmem>>) attributes {dimension_semantics = [#tpu.dimension_semantics<parallel>, #tpu.dimension_semantics<parallel>, #tpu.dimension_semantics<arbitrary>], iteration_bounds = array<i64: 2, 2, 1>, scalar_prefetch = 0 : i64, scratch_operands = 1 : i64, tpu.core_type = #tpu.core_type<tc>, window_params = [{transform_indices = @transform_0, window_bounds = array<i64: 1, 18, 18, 4>}, {transform_indices = @transform_1, window_bounds = array<i64: 36, 128>}, {transform_indices = @transform_2, window_bounds = array<i64: 1, 128>}, {transform_indices = @transform_3, window_bounds = array<i64: 1, 128>}, {transform_indices = @transform_4, window_bounds = array<i64: 1, 8, 16, 128>}]} {
    %c0_i32 = arith.constant 0 : i32
    %0 = arith.cmpi eq, %arg2, %c0_i32 : i32
    %1 = arith.extui %0 : i1 to i32
    %c0_i32_0 = arith.constant 0 : i32
    %2 = arith.cmpi ne, %1, %c0_i32_0 : i32
    scf.if %2 {
      %c8_i32 = arith.constant 8 : i32
      %21 = arith.muli %arg1, %c8_i32 : i32
      %22 = tpu.assume_multiple %21, 8 : i32
      %c0_i32_14 = arith.constant 0 : i32
      %23 = arith.addi %22, %c0_i32_14 : i32
      %c0_15 = arith.constant 0 : index
      %24 = arith.index_cast %23 : i32 to index
      %c0_16 = arith.constant 0 : index
      %c0_17 = arith.constant 0 : index
      %25 = vector.load %arg3[%c0_15, %24, %c0_16, %c0_17] : memref<1x18x18x4xbf16, #tpu.memory_space<vmem>>, vector<1x8x16x4xbf16>
      %26 = vector.shape_cast %25 : vector<1x8x16x4xbf16> to vector<8x16x4xbf16>
      %c0_18 = arith.constant 0 : index
      %c0_19 = arith.constant 0 : index
      %c0_20 = arith.constant 0 : index
      %27 = vector.load %arg8[%c0_18, %c0_19, %c0_20] : memref<8x16x36xbf16, #tpu.memory_space<vmem>>, vector<8x16x4xbf16>
      tpu.vector_store %arg8[%c0_18, %c0_19, %c0_20], %26 {strides = array<i32>} : memref<8x16x36xbf16, #tpu.memory_space<vmem>>, vector<8x16x4xbf16>,
      %c0_i32_21 = arith.constant 0 : i32
      %28 = arith.addi %22, %c0_i32_21 : i32
      %c0_22 = arith.constant 0 : index
      %29 = arith.index_cast %28 : i32 to index
      %c1 = arith.constant 1 : index
      %c0_23 = arith.constant 0 : index
      %30 = vector.load %arg3[%c0_22, %29, %c1, %c0_23] : memref<1x18x18x4xbf16, #tpu.memory_space<vmem>>, vector<1x8x16x4xbf16>
      %31 = vector.shape_cast %30 : vector<1x8x16x4xbf16> to vector<8x16x4xbf16>
      %c0_24 = arith.constant 0 : index
      %c0_25 = arith.constant 0 : index
      %c4 = arith.constant 4 : index
      %32 = vector.load %arg8[%c0_24, %c0_25, %c4] : memref<8x16x36xbf16, #tpu.memory_space<vmem>>, vector<8x16x4xbf16>
      tpu.vector_store %arg8[%c0_24, %c0_25, %c4], %31 {strides = array<i32>} : memref<8x16x36xbf16, #tpu.memory_space<vmem>>, vector<8x16x4xbf16>,
      %c0_i32_26 = arith.constant 0 : i32
      %33 = arith.addi %22, %c0_i32_26 : i32
      %c0_27 = arith.constant 0 : index
      %34 = arith.index_cast %33 : i32 to index
      %c2 = arith.constant 2 : index
      %c0_28 = arith.constant 0 : index
      %35 = vector.load %arg3[%c0_27, %34, %c2, %c0_28] : memref<1x18x18x4xbf16, #tpu.memory_space<vmem>>, vector<1x8x16x4xbf16>
      %36 = vector.shape_cast %35 : vector<1x8x16x4xbf16> to vector<8x16x4xbf16>
      %c0_29 = arith.constant 0 : index
      %c0_30 = arith.constant 0 : index
      %c8 = arith.constant 8 : index
      %37 = vector.load %arg8[%c0_29, %c0_30, %c8] : memref<8x16x36xbf16, #tpu.memory_space<vmem>>, vector<8x16x4xbf16>
      tpu.vector_store %arg8[%c0_29, %c0_30, %c8], %36 {strides = array<i32>} : memref<8x16x36xbf16, #tpu.memory_space<vmem>>, vector<8x16x4xbf16>,
      %c1_i32 = arith.constant 1 : i32
      %38 = arith.addi %22, %c1_i32 : i32
      %c0_31 = arith.constant 0 : index
      %39 = arith.index_cast %38 : i32 to index
      %c0_32 = arith.constant 0 : index
      %c0_33 = arith.constant 0 : index
      %40 = vector.load %arg3[%c0_31, %39, %c0_32, %c0_33] : memref<1x18x18x4xbf16, #tpu.memory_space<vmem>>, vector<1x8x16x4xbf16>
      %41 = vector.shape_cast %40 : vector<1x8x16x4xbf16> to vector<8x16x4xbf16>
      %c0_34 = arith.constant 0 : index
      %c0_35 = arith.constant 0 : index
      %c12 = arith.constant 12 : index
      %42 = vector.load %arg8[%c0_34, %c0_35, %c12] : memref<8x16x36xbf16, #tpu.memory_space<vmem>>, vector<8x16x4xbf16>
      tpu.vector_store %arg8[%c0_34, %c0_35, %c12], %41 {strides = array<i32>} : memref<8x16x36xbf16, #tpu.memory_space<vmem>>, vector<8x16x4xbf16>,
      %c1_i32_36 = arith.constant 1 : i32
      %43 = arith.addi %22, %c1_i32_36 : i32
      %c0_37 = arith.constant 0 : index
      %44 = arith.index_cast %43 : i32 to index
      %c1_38 = arith.constant 1 : index
      %c0_39 = arith.constant 0 : index
      %45 = vector.load %arg3[%c0_37, %44, %c1_38, %c0_39] : memref<1x18x18x4xbf16, #tpu.memory_space<vmem>>, vector<1x8x16x4xbf16>
      %46 = vector.shape_cast %45 : vector<1x8x16x4xbf16> to vector<8x16x4xbf16>
      %c0_40 = arith.constant 0 : index
      %c0_41 = arith.constant 0 : index
      %c16 = arith.constant 16 : index
      %47 = vector.load %arg8[%c0_40, %c0_41, %c16] : memref<8x16x36xbf16, #tpu.memory_space<vmem>>, vector<8x16x4xbf16>
      tpu.vector_store %arg8[%c0_40, %c0_41, %c16], %46 {strides = array<i32>} : memref<8x16x36xbf16, #tpu.memory_space<vmem>>, vector<8x16x4xbf16>,
      %c1_i32_42 = arith.constant 1 : i32
      %48 = arith.addi %22, %c1_i32_42 : i32
      %c0_43 = arith.constant 0 : index
      %49 = arith.index_cast %48 : i32 to index
      %c2_44 = arith.constant 2 : index
      %c0_45 = arith.constant 0 : index
      %50 = vector.load %arg3[%c0_43, %49, %c2_44, %c0_45] : memref<1x18x18x4xbf16, #tpu.memory_space<vmem>>, vector<1x8x16x4xbf16>
      %51 = vector.shape_cast %50 : vector<1x8x16x4xbf16> to vector<8x16x4xbf16>
      %c0_46 = arith.constant 0 : index
      %c0_47 = arith.constant 0 : index
      %c20 = arith.constant 20 : index
      %52 = vector.load %arg8[%c0_46, %c0_47, %c20] : memref<8x16x36xbf16, #tpu.memory_space<vmem>>, vector<8x16x4xbf16>
      tpu.vector_store %arg8[%c0_46, %c0_47, %c20], %51 {strides = array<i32>} : memref<8x16x36xbf16, #tpu.memory_space<vmem>>, vector<8x16x4xbf16>,
      %c2_i32 = arith.constant 2 : i32
      %53 = arith.addi %22, %c2_i32 : i32
      %c0_48 = arith.constant 0 : index
      %54 = arith.index_cast %53 : i32 to index
      %c0_49 = arith.constant 0 : index
      %c0_50 = arith.constant 0 : index
      %55 = vector.load %arg3[%c0_48, %54, %c0_49, %c0_50] : memref<1x18x18x4xbf16, #tpu.memory_space<vmem>>, vector<1x8x16x4xbf16>
      %56 = vector.shape_cast %55 : vector<1x8x16x4xbf16> to vector<8x16x4xbf16>
      %c0_51 = arith.constant 0 : index
      %c0_52 = arith.constant 0 : index
      %c24 = arith.constant 24 : index
      %57 = vector.load %arg8[%c0_51, %c0_52, %c24] : memref<8x16x36xbf16, #tpu.memory_space<vmem>>, vector<8x16x4xbf16>
      tpu.vector_store %arg8[%c0_51, %c0_52, %c24], %56 {strides = array<i32>} : memref<8x16x36xbf16, #tpu.memory_space<vmem>>, vector<8x16x4xbf16>,
      %c2_i32_53 = arith.constant 2 : i32
      %58 = arith.addi %22, %c2_i32_53 : i32
      %c0_54 = arith.constant 0 : index
      %59 = arith.index_cast %58 : i32 to index
      %c1_55 = arith.constant 1 : index
      %c0_56 = arith.constant 0 : index
      %60 = vector.load %arg3[%c0_54, %59, %c1_55, %c0_56] : memref<1x18x18x4xbf16, #tpu.memory_space<vmem>>, vector<1x8x16x4xbf16>
      %61 = vector.shape_cast %60 : vector<1x8x16x4xbf16> to vector<8x16x4xbf16>
      %c0_57 = arith.constant 0 : index
      %c0_58 = arith.constant 0 : index
      %c28 = arith.constant 28 : index
      %62 = vector.load %arg8[%c0_57, %c0_58, %c28] : memref<8x16x36xbf16, #tpu.memory_space<vmem>>, vector<8x16x4xbf16>
      tpu.vector_store %arg8[%c0_57, %c0_58, %c28], %61 {strides = array<i32>} : memref<8x16x36xbf16, #tpu.memory_space<vmem>>, vector<8x16x4xbf16>,
      %c2_i32_59 = arith.constant 2 : i32
      %63 = arith.addi %22, %c2_i32_59 : i32
      %c0_60 = arith.constant 0 : index
      %64 = arith.index_cast %63 : i32 to index
      %c2_61 = arith.constant 2 : index
      %c0_62 = arith.constant 0 : index
      %65 = vector.load %arg3[%c0_60, %64, %c2_61, %c0_62] : memref<1x18x18x4xbf16, #tpu.memory_space<vmem>>, vector<1x8x16x4xbf16>
      %66 = vector.shape_cast %65 : vector<1x8x16x4xbf16> to vector<8x16x4xbf16>
      %c0_63 = arith.constant 0 : index
      %c0_64 = arith.constant 0 : index
      %c32 = arith.constant 32 : index
      %67 = vector.load %arg8[%c0_63, %c0_64, %c32] : memref<8x16x36xbf16, #tpu.memory_space<vmem>>, vector<8x16x4xbf16>
      tpu.vector_store %arg8[%c0_63, %c0_64, %c32], %66 {strides = array<i32>} : memref<8x16x36xbf16, #tpu.memory_space<vmem>>, vector<8x16x4xbf16>,
    } else {
    }
    %c0 = arith.constant 0 : index
    %c0_1 = arith.constant 0 : index
    %c0_2 = arith.constant 0 : index
    %3 = vector.load %arg8[%c0, %c0_1, %c0_2] : memref<8x16x36xbf16, #tpu.memory_space<vmem>>, vector<8x16x36xbf16>
    %c0_3 = arith.constant 0 : index
    %c0_4 = arith.constant 0 : index
    %4 = vector.load %arg4[%c0_3, %c0_4] : memref<36x128xbf16, #tpu.memory_space<vmem>>, vector<36x128xbf16>
    %cst = arith.constant dense<0.000000e+00> : vector<8x16x128xf32>
    %5 = tpu.matmul %3, %4, %cst {dimension_numbers = #tpu.dot_dimension_numbers<[2], [0], [0, 1], [1], [0, 0, 0, 1, 1, 1], [], []>} : vector<8x16x36xbf16>, vector<36x128xbf16>, vector<8x16x128xf32> -> vector<8x16x128xf32>
    %c0_5 = arith.constant 0 : index
    %c0_6 = arith.constant 0 : index
    %6 = vector.load %arg5[%c0_5, %c0_6] : memref<1x128xf32, #tpu.memory_space<vmem>>, vector<1x128xf32>
    %7 = vector.shape_cast %6 : vector<1x128xf32> to vector<128xf32>
    %8 = vector.shape_cast %7 : vector<128xf32> to vector<1x1x128xf32>
    %9 = vector.broadcast %8 : vector<1x1x128xf32> to vector<8x16x128xf32>
    %10 = arith.mulf %5, %9 : vector<8x16x128xf32>
    %c0_7 = arith.constant 0 : index
    %c0_8 = arith.constant 0 : index
    %11 = vector.load %arg6[%c0_7, %c0_8] : memref<1x128xf32, #tpu.memory_space<vmem>>, vector<1x128xf32>
    %12 = vector.shape_cast %11 : vector<1x128xf32> to vector<128xf32>
    %13 = vector.shape_cast %12 : vector<128xf32> to vector<1x1x128xf32>
    %14 = vector.broadcast %13 : vector<1x1x128xf32> to vector<8x16x128xf32>
    %15 = arith.addf %10, %14 : vector<8x16x128xf32>
    %cst_9 = arith.constant 0.000000e+00 : f32
    %16 = vector.broadcast %cst_9 : f32 to vector<8x16x128xf32>
    %17 = arith.maximumf %15, %16 : vector<8x16x128xf32>
    %c0_10 = arith.constant 0 : index
    %c0_11 = arith.constant 0 : index
    %c0_12 = arith.constant 0 : index
    %c0_13 = arith.constant 0 : index
    %18 = vector.load %arg7[%c0_10, %c0_11, %c0_12, %c0_13] : memref<1x8x16x128xf32, #tpu.memory_space<vmem>>, vector<1x8x16x128xf32>
    %19 = vector.shape_cast %18 : vector<1x8x16x128xf32> to vector<8x16x128xf32>
    %20 = vector.shape_cast %17 : vector<8x16x128xf32> to vector<1x8x16x128xf32>
    tpu.vector_store %arg7[%c0_10, %c0_11, %c0_12, %c0_13], %20 {strides = array<i32>} : memref<1x8x16x128xf32, #tpu.memory_space<vmem>>, vector<1x8x16x128xf32>,
    return
  }
  func.func @transform_0(%arg0: i32, %arg1: i32, %arg2: i32) -> (i32, i32, i32, i32) {
    %c0_i32 = arith.constant 0 : i32
    %c0_i32_0 = arith.constant 0 : i32
    %c0_i32_1 = arith.constant 0 : i32
    %c0_i32_2 = arith.constant 0 : i32
    return %arg0, %c0_i32, %c0_i32_0, %c0_i32_1 : i32, i32, i32, i32
  }
  func.func @transform_1(%arg0: i32, %arg1: i32, %arg2: i32) -> (i32, i32) {
    %c0_i32 = arith.constant 0 : i32
    %c0_i32_0 = arith.constant 0 : i32
    return %c0_i32, %arg2 : i32, i32
  }
  func.func @transform_2(%arg0: i32, %arg1: i32, %arg2: i32) -> (i32, i32) {
    %c0_i32 = arith.constant 0 : i32
    %c0_i32_0 = arith.constant 0 : i32
    return %c0_i32, %arg2 : i32, i32
  }
  func.func @transform_3(%arg0: i32, %arg1: i32, %arg2: i32) -> (i32, i32) {
    %c0_i32 = arith.constant 0 : i32
    %c0_i32_0 = arith.constant 0 : i32
    return %c0_i32, %arg2 : i32, i32
  }
  func.func @transform_4(%arg0: i32, %arg1: i32, %arg2: i32) -> (i32, i32, i32, i32) {
    %c0_i32 = arith.constant 0 : i32
    %c0_i32_0 = arith.constant 0 : i32
    return %arg0, %arg1, %c0_i32, %arg2 : i32, i32, i32, i32
  }
}

</mosaic_0001>

<llo_original>
// kernel: conv_bn_relu.1
$region0: #{conv_bn_relu.1}
  #allocation0 [shape = 'u32[]', space=smem, size = 0x4, offset = 0x4, fixed_abs, tag = 'smem constant byte address 0x4 - core index']
  #allocation1 [shape = 'u32[72,128]{1,0:T(1,128)}', space=vmem, size = 0x9000, scoped, tag = 'internal scratch']
  #allocation2 [shape = 'bf16[8,16,36]{2,1,0:T(8,128)(2,1)}', space=vmem, size = 0x8000, scoped, tag = 'scratch operand']
  %s0 = inlined_call_operand.vmem [shape: bf16[2,18,18,4], index: 0, kind: input, shape index: {}]
  %s1 = inlined_call_operand.vmem [shape: bf16[36,128], index: 1, kind: input, shape index: {}]
  %s2 = inlined_call_operand.vmem [shape: f32[1,128], index: 2, kind: input, shape index: {}]
  %s3 = inlined_call_operand.vmem [shape: f32[1,128], index: 3, kind: input, shape index: {}]
  %s4 = inlined_call_operand.vmem [shape: f32[2,16,16,128], index: 4, kind: output, shape index: {}]
  %s5 = sld [smem:[#allocation0]]
  $region53: #{conv_bn_relu.1} parent=0
    _
  %s7 = ssub.s32 1, %s5
  %s8 = scalar_select 0, %s7, %s5
  loop: start=0, step=1, limit=6
  $region2: #{conv_bn_relu.1} parent=0 // loop_pre_header
    _
  $region3: #{conv_bn_relu.1} parent=0 // loop_header
    %s10 = sphi 0, %s14
    %p11 = scmp.ge.s32.totalorder %s10, 6
    %s17 = sphi 0, %s36
    %s18 = sphi 0, %s32
    %s19 = sphi 0, %s28
    %s20 = sphi 0, %s17
    %s21 = sphi 0, %s18
    %s22 = sphi 0, %s19
    %s23 = sphi 0, %s20
    %s24 = sphi 0, %s21
    %s25 = sphi 0, %s22
    %s39 = sphi 0, %s41
    %s42 = sphi 0, %s39
    %s43 = sphi 0, %s42
    %s59 = sphi 0, %s43
    %s65 = sphi 0, %s67
    %s68 = sphi 0, %s65
    %s69 = sphi 0, %s68
    %s85 = sphi 0, %s69
    %s91 = sphi 0, %s93
    %s94 = sphi 0, %s91
    %s95 = sphi 0, %s94
    %s111 = sphi 0, %s95
    %s117 = sphi 0, %s119
    %s120 = sphi 0, %s117
    %s121 = sphi 0, %s120
    %s137 = sphi 0, %s121
    %s147 = sphi 0, %s149
    %s150 = sphi 0, %s147
    %s151 = sphi 0, %s150
    %s167 = sphi 0, %s151
  $region4: #{conv_bn_relu.1} parent=0 // loop_header_branch
    %13 = sbr.rel (%p11) target = $region8
  $region5: #{conv_bn_relu.1} parent=0 // loop_body
    %s15 = ssub.s32 %s10, 1
    %s16 = ssub.s32 %s10, 2
    %s26 = sadd.s32 1, %s19
    %p27 = scmp.ge.s32.totalorder %s26, 1
    %s28 = scalar_select %p27, 0, %s26
    %s29 = sadd.s32 1, %s18
    %s30 = scalar_select %p27, %s29, %s18
    %p31 = scmp.ge.s32.totalorder %s30, 2
    %s32 = scalar_select %p31, 0, %s30
    %s33 = sadd.s32 1, %s17
    %s34 = scalar_select %p31, %s33, %s17
    %p35 = scmp.ge.s32.totalorder %s34, 2
    %s36 = scalar_select %p35, 0, %s34
    %s37 = ssub.s32 %s17, %s36
    %p38 = scmp.eq.s32.totalorder %s37, 0
    %s40 = sadd.s32 %s39, 1
    %s41 = scalar_select %p38, %s39, %s40
    %p44 = pneg %p38
    %p45 = scmp.eq.s32.totalorder %s10, 3
    %p46 = por %p44, %p45
    %p47 = scmp.ne.s32.totalorder %s39, %s42
    %p48 = scmp.eq.s32.totalorder %s10, 0
    %p49 = por %p47, %p48
    %p50 = scmp.ne.s32.totalorder %s39, %s42
    %p51 = scmp.eq.s32.totalorder %s15, 3
    %p52 = por %p50, %p51
    %p53 = scmp.ne.s32.totalorder %s42, %s43
    %p54 = scmp.eq.s32.totalorder %s15, 0
    %p55 = por %p53, %p54
    %p56 = scmp.ne.s32.totalorder %s42, %s43
    %p57 = scmp.eq.s32.totalorder %s16, 3
    %p58 = por %p56, %p57
    %p60 = scmp.ne.s32.totalorder %s43, %s59
    %p61 = scmp.eq.s32.totalorder %s16, 0
    %p62 = por %p60, %p61
    %s63 = ssub.s32 %s19, %s28
    %p64 = scmp.eq.s32.totalorder %s63, 0
    %s66 = sadd.s32 %s65, 1
    %s67 = scalar_select %p64, %s65, %s66
    %p70 = pneg %p64
    %p71 = scmp.eq.s32.totalorder %s10, 3
    %p72 = por %p70, %p71
    %p73 = scmp.ne.s32.totalorder %s65, %s68
    %p74 = scmp.eq.s32.totalorder %s10, 0
    %p75 = por %p73, %p74
    %p76 = scmp.ne.s32.totalorder %s65, %s68
    %p77 = scmp.eq.s32.totalorder %s15, 3
    %p78 = por %p76, %p77
    %p79 = scmp.ne.s32.totalorder %s68, %s69
    %p80 = scmp.eq.s32.totalorder %s15, 0
    %p81 = por %p79, %p80
    %p82 = scmp.ne.s32.totalorder %s68, %s69
    %p83 = scmp.eq.s32.totalorder %s16, 3
    %p84 = por %p82, %p83
    %p86 = scmp.ne.s32.totalorder %s69, %s85
    %p87 = scmp.eq.s32.totalorder %s16, 0
    %p88 = por %p86, %p87
    %s89 = ssub.s32 %s19, %s28
    %p90 = scmp.eq.s32.totalorder %s89, 0
    %s92 = sadd.s32 %s91, 1
    %s93 = scalar_select %p90, %s91, %s92
    %p96 = pneg %p90
    %p97 = scmp.eq.s32.totalorder %s10, 3
    %p98 = por %p96, %p97
    %p99 = scmp.ne.s32.totalorder %s91, %s94
    %p100 = scmp.eq.s32.totalorder %s10, 0
    %p101 = por %p99, %p100
    %p102 = scmp.ne.s32.totalorder %s91, %s94
    %p103 = scmp.eq.s32.totalorder %s15, 3
    %p104 = por %p102, %p103
    %p105 = scmp.ne.s32.totalorder %s94, %s95
    %p106 = scmp.eq.s32.totalorder %s15, 0
    %p107 = por %p105, %p106
    %p108 = scmp.ne.s32.totalorder %s94, %s95
    %p109 = scmp.eq.s32.totalorder %s16, 3
    %p110 = por %p108, %p109
    %p112 = scmp.ne.s32.totalorder %s95, %s111
    %p113 = scmp.eq.s32.totalorder %s16, 0
    %p114 = por %p112, %p113
    %s115 = ssub.s32 %s19, %s28
    %p116 = scmp.eq.s32.totalorder %s115, 0
    %s118 = sadd.s32 %s117, 1
    %s119 = scalar_select %p116, %s117, %s118
    %p122 = pneg %p116
    %p123 = scmp.eq.s32.totalorder %s10, 3
    %p124 = por %p122, %p123
    %p125 = scmp.ne.s32.totalorder %s117, %s120
    %p126 = scmp.eq.s32.totalorder %s10, 0
    %p127 = por %p125, %p126
    %p128 = scmp.ne.s32.totalorder %s117, %s120
    %p129 = scmp.eq.s32.totalorder %s15, 3
    %p130 = por %p128, %p129
    %p131 = scmp.ne.s32.totalorder %s120, %s121
    %p132 = scmp.eq.s32.totalorder %s15, 0
    %p133 = por %p131, %p132
    %p134 = scmp.ne.s32.totalorder %s120, %s121
    %p135 = scmp.eq.s32.totalorder %s16, 3
    %p136 = por %p134, %p135
    %p138 = scmp.ne.s32.totalorder %s121, %s137
    %p139 = scmp.eq.s32.totalorder %s16, 0
    %p140 = por %p138, %p139
    %s141 = ssub.s32 %s17, %s36
    %s142 = ssub.s32 %s18, %s32
    %s143 = sor.u32 %s141, %s142
    %s144 = ssub.s32 %s19, %s28
    %s145 = sor.u32 %s143, %s144
    %p146 = scmp.eq.s32.totalorder %s145, 0
    %s148 = sadd.s32 %s147, 1
    %s149 = scalar_select %p146, %s147, %s148
    %p152 = pneg %p146
    %p153 = scmp.eq.s32.totalorder %s10, 3
    %p154 = por %p152, %p153
    %p155 = scmp.ne.s32.totalorder %s147, %s150
    %p156 = scmp.eq.s32.totalorder %s10, 0
    %p157 = por %p155, %p156
    %p158 = scmp.ne.s32.totalorder %s147, %s150
    %p159 = scmp.eq.s32.totalorder %s15, 3
    %p160 = por %p158, %p159
    %p161 = scmp.ne.s32.totalorder %s150, %s151
    %p162 = scmp.eq.s32.totalorder %s15, 0
    %p163 = por %p161, %p162
    %p164 = scmp.ne.s32.totalorder %s150, %s151
    %p165 = scmp.eq.s32.totalorder %s16, 3
    %p166 = por %p164, %p165
    %p168 = scmp.ne.s32.totalorder %s151, %s167
    %p169 = scmp.eq.s32.totalorder %s16, 0
    %p170 = por %p168, %p169
    %p171 = scmp.le.s32.totalorder 1, %s10
    %p172 = scmp.lt.s32.totalorder %s10, 5
    %p173 = pnand %p171, %p172
    %p174 = pneg %p173
    // Predicated region
    $region9: #{conv_bn_relu.1} parent=5 // pred_check
      _
    $region10: #{conv_bn_relu.1} parent=5 // pred_check_branch
      %176 = sbr.rel (%p173) target = $region12
    $region11: #{conv_bn_relu.1} parent=5 // pred_region
      %s177 = ssub.s32 %s10, 1
      // Predicated region
      $region13: #{conv_bn_relu.1} parent=11 // pred_check
        %p178 = pneg %p81
      $region14: #{conv_bn_relu.1} parent=11 // pred_check_branch
        %180 = sbr.rel (%p178) target = $region16
      $region15: #{conv_bn_relu.1} parent=11 // pred_region
        %p181 = scmp.lt.s32.totalorder %s22, 0
        %s182 = scalar_select %p181, %s22, 0
        %s183 = smul.addr %s182, 4
        %s184 = scalar_lea.vmem %s1, %s183
      $region16: #{conv_bn_relu.1} parent=11 // pred_fallthru
        _
      // Predicated region
      $region17: #{conv_bn_relu.1} parent=11 // pred_check
        %p185 = pneg %p107
      $region18: #{conv_bn_relu.1} parent=11 // pred_check_branch
        %187 = sbr.rel (%p185) target = $region20
      $region19: #{conv_bn_relu.1} parent=11 // pred_region
        %p188 = scmp.lt.s32.totalorder %s22, 0
        %s189 = scalar_select %p188, %s22, 0
        %s190 = scalar_lea.vmem %s2, %s189
      $region20: #{conv_bn_relu.1} parent=11 // pred_fallthru
        _
      // Predicated region
      $region21: #{conv_bn_relu.1} parent=11 // pred_check
        %p191 = pneg %p133
      $region22: #{conv_bn_relu.1} parent=11 // pred_check_branch
        %193 = sbr.rel (%p191) target = $region24
      $region23: #{conv_bn_relu.1} parent=11 // pred_region
        %p194 = scmp.lt.s32.totalorder %s22, 0
        %s195 = scalar_select %p194, %s22, 0
        %s196 = scalar_lea.vmem %s3, %s195
      $region24: #{conv_bn_relu.1} parent=11 // pred_fallthru
        _
    $region12: #{conv_bn_relu.1} parent=5 // pred_fallthru
      _
    %p197 = scmp.lt.s32.totalorder %s10, 4
    // Predicated region
    $region25: #{conv_bn_relu.1} parent=5 // pred_check
      %p198 = pneg %p197
    $region26: #{conv_bn_relu.1} parent=5 // pred_check_branch
      %200 = sbr.rel (%p198) target = $region28
    $region27: #{conv_bn_relu.1} parent=5 // pred_region
      // Predicated region
      $region29: #{conv_bn_relu.1} parent=27 // pred_check
        %p201 = pneg %p49
      $region30: #{conv_bn_relu.1} parent=27 // pred_check_branch
        %203 = sbr.rel (%p201) target = $region32
      $region31: #{conv_bn_relu.1} parent=27 // pred_region
        %p204 = scmp.lt.s32.totalorder %s17, 1
        %s205 = scalar_select %p204, %s17, 1
        %s206 = smul.addr %s205, 54
        %s207 = smul.addr %s206, 4
        %s208 = scalar_lea.vmem %s0, %s207
      $region32: #{conv_bn_relu.1} parent=27 // pred_fallthru
        _
    $region28: #{conv_bn_relu.1} parent=5 // pred_fallthru
      _
    %p209 = scmp.le.s32.totalorder 1, %s10
    %p210 = scmp.lt.s32.totalorder %s10, 5
    %p211 = pnand %p209, %p210
    %p212 = pneg %p211
    // Predicated region
    $region33: #{conv_bn_relu.1} parent=5 // pred_check
      _
    $region34: #{conv_bn_relu.1} parent=5 // pred_check_branch
      %214 = sbr.rel (%p211) target = $region36
    $region35: #{conv_bn_relu.1} parent=5 // pred_region
      %s215 = ssub.s32 %s10, 1
      %p216 = scmp.lt.s32.totalorder %s20, 1
      %s217 = scalar_select %p216, %s20, 1
      %s218 = smul.addr %s217, 54
      %s219 = smul.addr %s218, 4
      %s220 = scalar_lea.vmem %s0, %s219
      %p221 = pneg %p55
      %p222 = pneg %p52
      %p223 = scmp.lt.s32.totalorder %s22, 0
      %s224 = scalar_select %p223, %s22, 0
      %s225 = smul.addr %s224, 4
      %s226 = scalar_lea.vmem %s1, %s225
      %p227 = pneg %p81
      %p228 = pneg %p78
      %p229 = scmp.lt.s32.totalorder %s22, 0
      %s230 = scalar_select %p229, %s22, 0
      %s231 = scalar_lea.vmem %s2, %s230
      %p232 = pneg %p107
      %p233 = pneg %p104
      %p234 = scmp.lt.s32.totalorder %s22, 0
      %s235 = scalar_select %p234, %s22, 0
      %s236 = scalar_lea.vmem %s3, %s235
      %p237 = pneg %p133
      %p238 = pneg %p130
      %p239 = pneg %p163
      %p240 = pneg %p160
      %s241 = smul.u32 8, %s21
      %p242 = scmp.lt.s32.totalorder %s20, 1
      %s243 = scalar_select %p242, %s20, 1
      %p244 = scmp.lt.s32.totalorder %s241, 15
      %s245 = scalar_select %p244, %s241, 15
      %p246 = scmp.lt.s32.totalorder %s22, 0
      %s247 = scalar_select %p246, %s22, 0
      %s248 = smul.addr %s245, 2
      %s249 = sadd.s32 %s247, %s248
      %s250 = smul.addr %s243, 32
      %s251 = sadd.s32 %s249, %s250
      %s252 = smul.addr %s251, 8
      %s253 = scalar_lea.vmem %s4, %s252
      %p254 = scmp.lt.s32.totalorder %s20, 1
      %s255 = scalar_select %p254, %s20, 1
      %s256 = smul.addr %s255, 54
      %s257 = smul.addr %s256, 4
      %s258 = scalar_lea.vmem %s0, %s257
      %p259 = scmp.lt.s32.totalorder %s22, 0
      %s260 = scalar_select %p259, %s22, 0
      %s261 = smul.addr %s260, 4
      %s262 = scalar_lea.vmem %s1, %s261
      %p263 = scmp.lt.s32.totalorder %s22, 0
      %s264 = scalar_select %p263, %s22, 0
      %s265 = scalar_lea.vmem %s2, %s264
      %p266 = scmp.lt.s32.totalorder %s22, 0
      %s267 = scalar_select %p266, %s22, 0
      %s268 = scalar_lea.vmem %s3, %s267
      %s269 = smul.u32 8, %s21
      %p270 = scmp.lt.s32.totalorder %s20, 1
      %s271 = scalar_select %p270, %s20, 1
      %p272 = scmp.lt.s32.totalorder %s269, 15
      %s273 = scalar_select %p272, %s269, 15
      %p274 = scmp.lt.s32.totalorder %s22, 0
      %s275 = scalar_select %p274, %s22, 0
      %s276 = smul.addr %s273, 2
      %s277 = sadd.s32 %s275, %s276
      %s278 = smul.addr %s271, 32
      %s279 = sadd.s32 %s277, %s278
      %s280 = smul.addr %s279, 8
      %s281 = scalar_lea.vmem %s4, %s280
      %s282 = smul.u32 8, %s21
      %p284 = scmp.eq.s32.totalorder %s22, 0
      // Predicated region
      $region37: #{conv_bn_relu.1} parent=35 // pred_check
        %p285 = pneg %p284
      $region38: #{conv_bn_relu.1} parent=35 // pred_check_branch
        %287 = sbr.rel (%p285) target = $region40
      $region39: #{conv_bn_relu.1} parent=35 // pred_region
        %s288 = smul.u32 %s21, 8
        %s289 = smul.u32 %s288, 3
        %s290 = smul.addr %s289, 4
        %s291 = scalar_lea.vmem %s258, %s290
        %v292 = vld [vmem:[%s291] sm:$0xf]
        %v293 = vld [vmem:[%s291 + $0x4] sm:$0xf]
        %v294 = vld [vmem:[%s291 + $0xc] sm:$0xf]
        %v295 = vld [vmem:[%s291 + $0x10] sm:$0xf]
        %v296 = vld [vmem:[%s291 + $0x18] sm:$0xf]
        %v297 = vld [vmem:[%s291 + $0x1c] sm:$0xf]
        %v298 = vld [vmem:[%s291 + $0x24] sm:$0xf]
        %v299 = vld [vmem:[%s291 + $0x28] sm:$0xf]
        %v300 = vld [vmem:[%s291 + $0x30] sm:$0xf]
        %v301 = vld [vmem:[%s291 + $0x34] sm:$0xf]
        %v302 = vld [vmem:[%s291 + $0x3c] sm:$0xf]
        %v303 = vld [vmem:[%s291 + $0x40] sm:$0xf]
        %v304 = vld [vmem:[%s291 + $0x48] sm:$0xf]
        %v305 = vld [vmem:[%s291 + $0x4c] sm:$0xf]
        %v306 = vld [vmem:[%s291 + $0x54] sm:$0xf]
        %v307 = vld [vmem:[%s291 + $0x58] sm:$0xf]
        %vm308 = vcmask 27648
        %309 = vst.msk [vmem:[#allocation2] sm:$0xf] %vm308, %v292
        %310 = vst.msk [vmem:[#allocation2 + $0x4] sm:$0xf] %vm308, %v293
        %311 = vst.msk [vmem:[#allocation2 + $0x8] sm:$0xf] %vm308, %v294
        %312 = vst.msk [vmem:[#allocation2 + $0xc] sm:$0xf] %vm308, %v295
        %313 = vst.msk [vmem:[#allocation2 + $0x10] sm:$0xf] %vm308, %v296
        %314 = vst.msk [vmem:[#allocation2 + $0x14] sm:$0xf] %vm308, %v297
        %315 = vst.msk [vmem:[#allocation2 + $0x18] sm:$0xf] %vm308, %v298
        %316 = vst.msk [vmem:[#allocation2 + $0x1c] sm:$0xf] %vm308, %v299
        %317 = vst.msk [vmem:[#allocation2 + $0x20] sm:$0xf] %vm308, %v300
        %318 = vst.msk [vmem:[#allocation2 + $0x24] sm:$0xf] %vm308, %v301
        %319 = vst.msk [vmem:[#allocation2 + $0x28] sm:$0xf] %vm308, %v302
        %320 = vst.msk [vmem:[#allocation2 + $0x2c] sm:$0xf] %vm308, %v303
        %321 = vst.msk [vmem:[#allocation2 + $0x30] sm:$0xf] %vm308, %v304
        %322 = vst.msk [vmem:[#allocation2 + $0x34] sm:$0xf] %vm308, %v305
        %323 = vst.msk [vmem:[#allocation2 + $0x38] sm:$0xf] %vm308, %v306
        %324 = vst.msk [vmem:[#allocation2 + $0x3c] sm:$0xf] %vm308, %v307
        %v325 = vld [vmem:[%s291] sm:$0xf]
        %v326 = vld [vmem:[%s291 + $0x4] sm:$0xf]
        %v327 = vld [vmem:[%s291 + $0x8] sm:$0x1]
        %v328 = vld [vmem:[%s291 + $0xc] sm:$0xf]
        %v329 = vld [vmem:[%s291 + $0x10] sm:$0xf]
        %v330 = vld [vmem:[%s291 + $0x14] sm:$0x1]
        %v331 = vld [vmem:[%s291 + $0x18] sm:$0xf]
        %v332 = vld [vmem:[%s291 + $0x1c] sm:$0xf]
        %v333 = vld [vmem:[%s291 + $0x20] sm:$0x1]
        %v334 = vld [vmem:[%s291 + $0x24] sm:$0xf]
        %v335 = vld [vmem:[%s291 + $0x28] sm:$0xf]
        %v336 = vld [vmem:[%s291 + $0x2c] sm:$0x1]
        %v337 = vld [vmem:[%s291 + $0x30] sm:$0xf]
        %v338 = vld [vmem:[%s291 + $0x34] sm:$0xf]
        %v339 = vld [vmem:[%s291 + $0x38] sm:$0x1]
        %v340 = vld [vmem:[%s291 + $0x3c] sm:$0xf]
        %v341 = vld [vmem:[%s291 + $0x40] sm:$0xf]
        %v342 = vld [vmem:[%s291 + $0x44] sm:$0x1]
        %v343 = vld [vmem:[%s291 + $0x48] sm:$0xf]
        %v344 = vld [vmem:[%s291 + $0x4c] sm:$0xf]
        %v345 = vld [vmem:[%s291 + $0x50] sm:$0x1]
        %v346 = vld [vmem:[%s291 + $0x54] sm:$0xf]
        %v347 = vld [vmem:[%s291 + $0x58] sm:$0xf]
        %v348 = vld [vmem:[%s291 + $0x5c] sm:$0x1]
        %vm349 = vsmask.f32 3328
        %vm350 = vsmask.f32 7440
        %vm351 = vmor %vm349, %vm350
        %v353 = vshrl.u32 %v325, 16
        %v355 = vrot.slane %v353, 4
        %v356 = vshll.u32 %v325, 16
        %v358 = vrot.slane %v356, 5
        %v359 = vor.u32 %v355, %v358
        %v360 = vrot.slane %v359, 4
        %v362 = vshll.u32 %v326, 16
        %v364 = vrot.slane %v362, 5
        %v365 = vsel %vm351, %v360, %v364
        %v366 = vshrl.u32 %v326, 16
        %v368 = vrot.slane %v366, 4
        %v369 = vor.u32 %v368, %v364
        %v370 = vrot.slane %v369, 4
        %v372 = vshll.u32 %v327, 16
        %v374 = vrot.slane %v372, 5
        %v375 = vsel %vm351, %v370, %v374
        %v377 = vshrl.u32 %v328, 16
        %v379 = vrot.slane %v377, 4
        %v380 = vshll.u32 %v328, 16
        %v382 = vrot.slane %v380, 5
        %v383 = vor.u32 %v379, %v382
        %v384 = vrot.slane %v383, 4
        %v386 = vshll.u32 %v329, 16
        %v388 = vrot.slane %v386, 5
        %v389 = vsel %vm351, %v384, %v388
        %v390 = vshrl.u32 %v329, 16
        %v392 = vrot.slane %v390, 4
        %v393 = vor.u32 %v392, %v388
        %v394 = vrot.slane %v393, 4
        %v396 = vshll.u32 %v330, 16
        %v398 = vrot.slane %v396, 5
        %v399 = vsel %vm351, %v394, %v398
        %v401 = vshrl.u32 %v331, 16
        %v403 = vrot.slane %v401, 4
        %v404 = vshll.u32 %v331, 16
        %v406 = vrot.slane %v404, 5
        %v407 = vor.u32 %v403, %v406
        %v408 = vrot.slane %v407, 4
        %v410 = vshll.u32 %v332, 16
        %v412 = vrot.slane %v410, 5
        %v413 = vsel %vm351, %v408, %v412
        %v414 = vshrl.u32 %v332, 16
        %v416 = vrot.slane %v414, 4
        %v417 = vor.u32 %v416, %v412
        %v418 = vrot.slane %v417, 4
        %v420 = vshll.u32 %v333, 16
        %v422 = vrot.slane %v420, 5
        %v423 = vsel %vm351, %v418, %v422
        %v425 = vshrl.u32 %v334, 16
        %v427 = vrot.slane %v425, 4
        %v428 = vshll.u32 %v334, 16
        %v430 = vrot.slane %v428, 5
        %v431 = vor.u32 %v427, %v430
        %v432 = vrot.slane %v431, 4
        %v434 = vshll.u32 %v335, 16
        %v436 = vrot.slane %v434, 5
        %v437 = vsel %vm351, %v432, %v436
        %v438 = vshrl.u32 %v335, 16
        %v440 = vrot.slane %v438, 4
        %v441 = vor.u32 %v440, %v436
        %v442 = vrot.slane %v441, 4
        %v444 = vshll.u32 %v336, 16
        %v446 = vrot.slane %v444, 5
        %v447 = vsel %vm351, %v442, %v446
        %v449 = vshrl.u32 %v337, 16
        %v451 = vrot.slane %v449, 4
        %v452 = vshll.u32 %v337, 16
        %v454 = vrot.slane %v452, 5
        %v455 = vor.u32 %v451, %v454
        %v456 = vrot.slane %v455, 4
        %v458 = vshll.u32 %v338, 16
        %v460 = vrot.slane %v458, 5
        %v461 = vsel %vm351, %v456, %v460
        %v462 = vshrl.u32 %v338, 16
        %v464 = vrot.slane %v462, 4
        %v465 = vor.u32 %v464, %v460
        %v466 = vrot.slane %v465, 4
        %v468 = vshll.u32 %v339, 16
        %v470 = vrot.slane %v468, 5
        %v471 = vsel %vm351, %v466, %v470
        %v473 = vshrl.u32 %v340, 16
        %v475 = vrot.slane %v473, 4
        %v476 = vshll.u32 %v340, 16
        %v478 = vrot.slane %v476, 5
        %v479 = vor.u32 %v475, %v478
        %v480 = vrot.slane %v479, 4
        %v482 = vshll.u32 %v341, 16
        %v484 = vrot.slane %v482, 5
        %v485 = vsel %vm351, %v480, %v484
        %v486 = vshrl.u32 %v341, 16
        %v488 = vrot.slane %v486, 4
        %v489 = vor.u32 %v488, %v484
        %v490 = vrot.slane %v489, 4
        %v492 = vshll.u32 %v342, 16
        %v494 = vrot.slane %v492, 5
        %v495 = vsel %vm351, %v490, %v494
        %v497 = vshrl.u32 %v343, 16
        %v499 = vrot.slane %v497, 4
        %v500 = vshll.u32 %v343, 16
        %v502 = vrot.slane %v500, 5
        %v503 = vor.u32 %v499, %v502
        %v504 = vrot.slane %v503, 4
        %v506 = vshll.u32 %v344, 16
        %v508 = vrot.slane %v506, 5
        %v509 = vsel %vm351, %v504, %v508
        %v510 = vshrl.u32 %v344, 16
        %v512 = vrot.slane %v510, 4
        %v513 = vor.u32 %v512, %v508
        %v514 = vrot.slane %v513, 4
        %v516 = vshll.u32 %v345, 16
        %v518 = vrot.slane %v516, 5
        %v519 = vsel %vm351, %v514, %v518
        %v521 = vshrl.u32 %v346, 16
        %v523 = vrot.slane %v521, 4
        %v524 = vshll.u32 %v346, 16
        %v526 = vrot.slane %v524, 5
        %v527 = vor.u32 %v523, %v526
        %v528 = vrot.slane %v527, 4
        %v530 = vshll.u32 %v347, 16
        %v532 = vrot.slane %v530, 5
        %v533 = vsel %vm351, %v528, %v532
        %v534 = vshrl.u32 %v347, 16
        %v536 = vrot.slane %v534, 4
        %v537 = vor.u32 %v536, %v532
        %v538 = vrot.slane %v537, 4
        %v540 = vshll.u32 %v348, 16
        %v542 = vrot.slane %v540, 5
        %v543 = vsel %vm351, %v538, %v542
        %544 = vrot.lane.b32.xlu0 %v365, 4
        %v545 = vpop.permute.xlu0 %544
        %546 = vrot.lane.b32.xlu0 %v375, 4
        %v547 = vpop.permute.xlu0 %546
        %548 = vrot.lane.b32.xlu0 %v389, 4
        %v549 = vpop.permute.xlu0 %548
        %550 = vrot.lane.b32.xlu0 %v399, 4
        %v551 = vpop.permute.xlu0 %550
        %552 = vrot.lane.b32.xlu0 %v413, 4
        %v553 = vpop.permute.xlu0 %552
        %554 = vrot.lane.b32.xlu0 %v423, 4
        %v555 = vpop.permute.xlu0 %554
        %556 = vrot.lane.b32.xlu0 %v437, 4
        %v557 = vpop.permute.xlu0 %556
        %558 = vrot.lane.b32.xlu0 %v447, 4
        %v559 = vpop.permute.xlu0 %558
        %560 = vrot.lane.b32.xlu0 %v461, 4
        %v561 = vpop.permute.xlu0 %560
        %562 = vrot.lane.b32.xlu0 %v471, 4
        %v563 = vpop.permute.xlu0 %562
        %564 = vrot.lane.b32.xlu0 %v485, 4
        %v565 = vpop.permute.xlu0 %564
        %566 = vrot.lane.b32.xlu0 %v495, 4
        %v567 = vpop.permute.xlu0 %566
        %568 = vrot.lane.b32.xlu0 %v509, 4
        %v569 = vpop.permute.xlu0 %568
        %570 = vrot.lane.b32.xlu0 %v519, 4
        %v571 = vpop.permute.xlu0 %570
        %572 = vrot.lane.b32.xlu0 %v533, 4
        %v573 = vpop.permute.xlu0 %572
        %574 = vrot.lane.b32.xlu0 %v543, 4
        %v575 = vpop.permute.xlu0 %574
        %vm592 = vcmask 60448
        %593 = vst.msk [vmem:[#allocation2] sm:$0xf] %vm592, %v545
        %594 = vst.msk [vmem:[#allocation2 + $0x4] sm:$0xf] %vm592, %v547
        %595 = vst.msk [vmem:[#allocation2 + $0x8] sm:$0xf] %vm592, %v549
        %596 = vst.msk [vmem:[#allocation2 + $0xc] sm:$0xf] %vm592, %v551
        %597 = vst.msk [vmem:[#allocation2 + $0x10] sm:$0xf] %vm592, %v553
        %598 = vst.msk [vmem:[#allocation2 + $0x14] sm:$0xf] %vm592, %v555
        %599 = vst.msk [vmem:[#allocation2 + $0x18] sm:$0xf] %vm592, %v557
        %600 = vst.msk [vmem:[#allocation2 + $0x1c] sm:$0xf] %vm592, %v559
        %601 = vst.msk [vmem:[#allocation2 + $0x20] sm:$0xf] %vm592, %v561
        %602 = vst.msk [vmem:[#allocation2 + $0x24] sm:$0xf] %vm592, %v563
        %603 = vst.msk [vmem:[#allocation2 + $0x28] sm:$0xf] %vm592, %v565
        %604 = vst.msk [vmem:[#allocation2 + $0x2c] sm:$0xf] %vm592, %v567
        %605 = vst.msk [vmem:[#allocation2 + $0x30] sm:$0xf] %vm592, %v569
        %606 = vst.msk [vmem:[#allocation2 + $0x34] sm:$0xf] %vm592, %v571
        %607 = vst.msk [vmem:[#allocation2 + $0x38] sm:$0xf] %vm592, %v573
        %608 = vst.msk [vmem:[#allocation2 + $0x3c] sm:$0xf] %vm592, %v575
        %v609 = vld [vmem:[%s291] sm:$0xe]
        %v610 = vld [vmem:[%s291 + $0x4] sm:$0xf]
        %v611 = vld [vmem:[%s291 + $0x8] sm:$0x1]
        %v612 = vld [vmem:[%s291 + $0xc] sm:$0xe]
        %v613 = vld [vmem:[%s291 + $0x10] sm:$0xf]
        %v614 = vld [vmem:[%s291 + $0x14] sm:$0x1]
        %v615 = vld [vmem:[%s291 + $0x18] sm:$0xe]
        %v616 = vld [vmem:[%s291 + $0x1c] sm:$0xf]
        %v617 = vld [vmem:[%s291 + $0x20] sm:$0x1]
        %v618 = vld [vmem:[%s291 + $0x24] sm:$0xe]
        %v619 = vld [vmem:[%s291 + $0x28] sm:$0xf]
        %v620 = vld [vmem:[%s291 + $0x2c] sm:$0x1]
        %v621 = vld [vmem:[%s291 + $0x30] sm:$0xe]
        %v622 = vld [vmem:[%s291 + $0x34] sm:$0xf]
        %v623 = vld [vmem:[%s291 + $0x38] sm:$0x1]
        %v624 = vld [vmem:[%s291 + $0x3c] sm:$0xe]
        %v625 = vld [vmem:[%s291 + $0x40] sm:$0xf]
        %v626 = vld [vmem:[%s291 + $0x44] sm:$0x1]
        %v627 = vld [vmem:[%s291 + $0x48] sm:$0xe]
        %v628 = vld [vmem:[%s291 + $0x4c] sm:$0xf]
        %v629 = vld [vmem:[%s291 + $0x50] sm:$0x1]
        %v630 = vld [vmem:[%s291 + $0x54] sm:$0xe]
        %v631 = vld [vmem:[%s291 + $0x58] sm:$0xf]
        %v632 = vld [vmem:[%s291 + $0x5c] sm:$0x1]
        %vm657 = vcmask 1042432
        %vm658 = vcmask 1046532
        %vm659 = vmor %vm657, %vm658
        %v660 = vrot.slane %v609, 5
        %v661 = vrot.slane %v660, 4
        %v662 = vrot.slane %v610, 5
        %v663 = vsel %vm659, %v661, %v662
        %v664 = vrot.slane %v662, 4
        %v665 = vrot.slane %v611, 5
        %v666 = vsel %vm659, %v664, %v665
        %v667 = vrot.slane %v612, 5
        %v668 = vrot.slane %v667, 4
        %v669 = vrot.slane %v613, 5
        %v670 = vsel %vm659, %v668, %v669
        %v671 = vrot.slane %v669, 4
        %v672 = vrot.slane %v614, 5
        %v673 = vsel %vm659, %v671, %v672
        %v674 = vrot.slane %v615, 5
        %v675 = vrot.slane %v674, 4
        %v676 = vrot.slane %v616, 5
        %v677 = vsel %vm659, %v675, %v676
        %v678 = vrot.slane %v676, 4
        %v679 = vrot.slane %v617, 5
        %v680 = vsel %vm659, %v678, %v679
        %v681 = vrot.slane %v618, 5
        %v682 = vrot.slane %v681, 4
        %v683 = vrot.slane %v619, 5
        %v684 = vsel %vm659, %v682, %v683
        %v685 = vrot.slane %v683, 4
        %v686 = vrot.slane %v620, 5
        %v687 = vsel %vm659, %v685, %v686
        %v688 = vrot.slane %v621, 5
        %v689 = vrot.slane %v688, 4
        %v690 = vrot.slane %v622, 5
        %v691 = vsel %vm659, %v689, %v690
        %v692 = vrot.slane %v690, 4
        %v693 = vrot.slane %v623, 5
        %v694 = vsel %vm659, %v692, %v693
        %v695 = vrot.slane %v624, 5
        %v696 = vrot.slane %v695, 4
        %v697 = vrot.slane %v625, 5
        %v698 = vsel %vm659, %v696, %v697
        %v699 = vrot.slane %v697, 4
        %v700 = vrot.slane %v626, 5
        %v701 = vsel %vm659, %v699, %v700
        %v702 = vrot.slane %v627, 5
        %v703 = vrot.slane %v702, 4
        %v704 = vrot.slane %v628, 5
        %v705 = vsel %vm659, %v703, %v704
        %v706 = vrot.slane %v704, 4
        %v707 = vrot.slane %v629, 5
        %v708 = vsel %vm659, %v706, %v707
        %v709 = vrot.slane %v630, 5
        %v710 = vrot.slane %v709, 4
        %v711 = vrot.slane %v631, 5
        %v712 = vsel %vm659, %v710, %v711
        %v713 = vrot.slane %v711, 4
        %v714 = vrot.slane %v632, 5
        %v715 = vsel %vm659, %v713, %v714
        %716 = vrot.lane.b32.xlu0 %v663, 8
        %v717 = vpop.permute.xlu0 %716
        %718 = vrot.lane.b32.xlu0 %v666, 8
        %v719 = vpop.permute.xlu0 %718
        %720 = vrot.lane.b32.xlu0 %v670, 8
        %v721 = vpop.permute.xlu0 %720
        %722 = vrot.lane.b32.xlu0 %v673, 8
        %v723 = vpop.permute.xlu0 %722
        %724 = vrot.lane.b32.xlu0 %v677, 8
        %v725 = vpop.permute.xlu0 %724
        %726 = vrot.lane.b32.xlu0 %v680, 8
        %v727 = vpop.permute.xlu0 %726
        %728 = vrot.lane.b32.xlu0 %v684, 8
        %v729 = vpop.permute.xlu0 %728
        %730 = vrot.lane.b32.xlu0 %v687, 8
        %v731 = vpop.permute.xlu0 %730
        %732 = vrot.lane.b32.xlu0 %v691, 8
        %v733 = vpop.permute.xlu0 %732
        %734 = vrot.lane.b32.xlu0 %v694, 8
        %v735 = vpop.permute.xlu0 %734
        %736 = vrot.lane.b32.xlu0 %v698, 8
        %v737 = vpop.permute.xlu0 %736
        %738 = vrot.lane.b32.xlu0 %v701, 8
        %v739 = vpop.permute.xlu0 %738
        %740 = vrot.lane.b32.xlu0 %v705, 8
        %v741 = vpop.permute.xlu0 %740
        %742 = vrot.lane.b32.xlu0 %v708, 8
        %v743 = vpop.permute.xlu0 %742
        %744 = vrot.lane.b32.xlu0 %v712, 8
        %v745 = vpop.permute.xlu0 %744
        %746 = vrot.lane.b32.xlu0 %v715, 8
        %v747 = vpop.permute.xlu0 %746
        %vm764 = vcmask 93248
        %765 = vst.msk [vmem:[#allocation2] sm:$0xf] %vm764, %v717
        %766 = vst.msk [vmem:[#allocation2 + $0x4] sm:$0xf] %vm764, %v719
        %767 = vst.msk [vmem:[#allocation2 + $0x8] sm:$0xf] %vm764, %v721
        %768 = vst.msk [vmem:[#allocation2 + $0xc] sm:$0xf] %vm764, %v723
        %769 = vst.msk [vmem:[#allocation2 + $0x10] sm:$0xf] %vm764, %v725
        %770 = vst.msk [vmem:[#allocation2 + $0x14] sm:$0xf] %vm764, %v727
        %771 = vst.msk [vmem:[#allocation2 + $0x18] sm:$0xf] %vm764, %v729
        %772 = vst.msk [vmem:[#allocation2 + $0x1c] sm:$0xf] %vm764, %v731
        %773 = vst.msk [vmem:[#allocation2 + $0x20] sm:$0xf] %vm764, %v733
        %774 = vst.msk [vmem:[#allocation2 + $0x24] sm:$0xf] %vm764, %v735
        %775 = vst.msk [vmem:[#allocation2 + $0x28] sm:$0xf] %vm764, %v737
        %776 = vst.msk [vmem:[#allocation2 + $0x2c] sm:$0xf] %vm764, %v739
        %777 = vst.msk [vmem:[#allocation2 + $0x30] sm:$0xf] %vm764, %v741
        %778 = vst.msk [vmem:[#allocation2 + $0x34] sm:$0xf] %vm764, %v743
        %779 = vst.msk [vmem:[#allocation2 + $0x38] sm:$0xf] %vm764, %v745
        %780 = vst.msk [vmem:[#allocation2 + $0x3c] sm:$0xf] %vm764, %v747
        %s781 = sadd.s32 %s288, 1
        %s782 = smul.u32 %s781, 3
        %s783 = smul.addr %s782, 4
        %s784 = scalar_lea.vmem %s258, %s783
        %v785 = vld [vmem:[%s784] sm:$0xf]
        %v786 = vld [vmem:[%s784 + $0x4] sm:$0xf]
        %v787 = vld [vmem:[%s784 + $0xc] sm:$0xf]
        %v788 = vld [vmem:[%s784 + $0x10] sm:$0xf]
        %v789 = vld [vmem:[%s784 + $0x18] sm:$0xf]
        %v790 = vld [vmem:[%s784 + $0x1c] sm:$0xf]
        %v791 = vld [vmem:[%s784 + $0x24] sm:$0xf]
        %v792 = vld [vmem:[%s784 + $0x28] sm:$0xf]
        %v793 = vld [vmem:[%s784 + $0x30] sm:$0xf]
        %v794 = vld [vmem:[%s784 + $0x34] sm:$0xf]
        %v795 = vld [vmem:[%s784 + $0x3c] sm:$0xf]
        %v796 = vld [vmem:[%s784 + $0x40] sm:$0xf]
        %v797 = vld [vmem:[%s784 + $0x48] sm:$0xf]
        %v798 = vld [vmem:[%s784 + $0x4c] sm:$0xf]
        %v799 = vld [vmem:[%s784 + $0x54] sm:$0xf]
        %v800 = vld [vmem:[%s784 + $0x58] sm:$0xf]
        %817 = vrot.lane.b32.xlu0 %v785, 12
        %v818 = vpop.permute.xlu0 %817
        %819 = vrot.lane.b32.xlu0 %v786, 12
        %v820 = vpop.permute.xlu0 %819
        %821 = vrot.lane.b32.xlu0 %v787, 12
        %v822 = vpop.permute.xlu0 %821
        %823 = vrot.lane.b32.xlu0 %v788, 12
        %v824 = vpop.permute.xlu0 %823
        %825 = vrot.lane.b32.xlu0 %v789, 12
        %v826 = vpop.permute.xlu0 %825
        %827 = vrot.lane.b32.xlu0 %v790, 12
        %v828 = vpop.permute.xlu0 %827
        %829 = vrot.lane.b32.xlu0 %v791, 12
        %v830 = vpop.permute.xlu0 %829
        %831 = vrot.lane.b32.xlu0 %v792, 12
        %v832 = vpop.permute.xlu0 %831
        %833 = vrot.lane.b32.xlu0 %v793, 12
        %v834 = vpop.permute.xlu0 %833
        %835 = vrot.lane.b32.xlu0 %v794, 12
        %v836 = vpop.permute.xlu0 %835
        %837 = vrot.lane.b32.xlu0 %v795, 12
        %v838 = vpop.permute.xlu0 %837
        %839 = vrot.lane.b32.xlu0 %v796, 12
        %v840 = vpop.permute.xlu0 %839
        %841 = vrot.lane.b32.xlu0 %v797, 12
        %v842 = vpop.permute.xlu0 %841
        %843 = vrot.lane.b32.xlu0 %v798, 12
        %v844 = vpop.permute.xlu0 %843
        %845 = vrot.lane.b32.xlu0 %v799, 12
        %v846 = vpop.permute.xlu0 %845
        %847 = vrot.lane.b32.xlu0 %v800, 12
        %v848 = vpop.permute.xlu0 %847
        %vm865 = vcmask 126048
        %866 = vst.msk [vmem:[#allocation2] sm:$0xf] %vm865, %v818
        %867 = vst.msk [vmem:[#allocation2 + $0x4] sm:$0xf] %vm865, %v820
        %868 = vst.msk [vmem:[#allocation2 + $0x8] sm:$0xf] %vm865, %v822
        %869 = vst.msk [vmem:[#allocation2 + $0xc] sm:$0xf] %vm865, %v824
        %870 = vst.msk [vmem:[#allocation2 + $0x10] sm:$0xf] %vm865, %v826
        %871 = vst.msk [vmem:[#allocation2 + $0x14] sm:$0xf] %vm865, %v828
        %872 = vst.msk [vmem:[#allocation2 + $0x18] sm:$0xf] %vm865, %v830
        %873 = vst.msk [vmem:[#allocation2 + $0x1c] sm:$0xf] %vm865, %v832
        %874 = vst.msk [vmem:[#allocation2 + $0x20] sm:$0xf] %vm865, %v834
        %875 = vst.msk [vmem:[#allocation2 + $0x24] sm:$0xf] %vm865, %v836
        %876 = vst.msk [vmem:[#allocation2 + $0x28] sm:$0xf] %vm865, %v838
        %877 = vst.msk [vmem:[#allocation2 + $0x2c] sm:$0xf] %vm865, %v840
        %878 = vst.msk [vmem:[#allocation2 + $0x30] sm:$0xf] %vm865, %v842
        %879 = vst.msk [vmem:[#allocation2 + $0x34] sm:$0xf] %vm865, %v844
        %880 = vst.msk [vmem:[#allocation2 + $0x38] sm:$0xf] %vm865, %v846
        %881 = vst.msk [vmem:[#allocation2 + $0x3c] sm:$0xf] %vm865, %v848
        %v882 = vld [vmem:[%s784] sm:$0xf]
        %v883 = vld [vmem:[%s784 + $0x4] sm:$0xf]
        %v884 = vld [vmem:[%s784 + $0x8] sm:$0x1]
        %v885 = vld [vmem:[%s784 + $0xc] sm:$0xf]
        %v886 = vld [vmem:[%s784 + $0x10] sm:$0xf]
        %v887 = vld [vmem:[%s784 + $0x14] sm:$0x1]
        %v888 = vld [vmem:[%s784 + $0x18] sm:$0xf]
        %v889 = vld [vmem:[%s784 + $0x1c] sm:$0xf]
        %v890 = vld [vmem:[%s784 + $0x20] sm:$0x1]
        %v891 = vld [vmem:[%s784 + $0x24] sm:$0xf]
        %v892 = vld [vmem:[%s784 + $0x28] sm:$0xf]
        %v893 = vld [vmem:[%s784 + $0x2c] sm:$0x1]
        %v894 = vld [vmem:[%s784 + $0x30] sm:$0xf]
        %v895 = vld [vmem:[%s784 + $0x34] sm:$0xf]
        %v896 = vld [vmem:[%s784 + $0x38] sm:$0x1]
        %v897 = vld [vmem:[%s784 + $0x3c] sm:$0xf]
        %v898 = vld [vmem:[%s784 + $0x40] sm:$0xf]
        %v899 = vld [vmem:[%s784 + $0x44] sm:$0x1]
        %v900 = vld [vmem:[%s784 + $0x48] sm:$0xf]
        %v901 = vld [vmem:[%s784 + $0x4c] sm:$0xf]
        %v902 = vld [vmem:[%s784 + $0x50] sm:$0x1]
        %v903 = vld [vmem:[%s784 + $0x54] sm:$0xf]
        %v904 = vld [vmem:[%s784 + $0x58] sm:$0xf]
        %v905 = vld [vmem:[%s784 + $0x5c] sm:$0x1]
        %v907 = vshrl.u32 %v882, 16
        %v909 = vrot.slane %v907, 4
        %v910 = vshll.u32 %v882, 16
        %v912 = vrot.slane %v910, 5
        %v913 = vor.u32 %v909, %v912
        %v914 = vrot.slane %v913, 4
        %v916 = vshll.u32 %v883, 16
        %v918 = vrot.slane %v916, 5
        %v919 = vsel %vm351, %v914, %v918
        %v920 = vshrl.u32 %v883, 16
        %v922 = vrot.slane %v920, 4
        %v923 = vor.u32 %v922, %v918
        %v924 = vrot.slane %v923, 4
        %v926 = vshll.u32 %v884, 16
        %v928 = vrot.slane %v926, 5
        %v929 = vsel %vm351, %v924, %v928
        %v931 = vshrl.u32 %v885, 16
        %v933 = vrot.slane %v931, 4
        %v934 = vshll.u32 %v885, 16
        %v936 = vrot.slane %v934, 5
        %v937 = vor.u32 %v933, %v936
        %v938 = vrot.slane %v937, 4
        %v940 = vshll.u32 %v886, 16
        %v942 = vrot.slane %v940, 5
        %v943 = vsel %vm351, %v938, %v942
        %v944 = vshrl.u32 %v886, 16
        %v946 = vrot.slane %v944, 4
        %v947 = vor.u32 %v946, %v942
        %v948 = vrot.slane %v947, 4
        %v950 = vshll.u32 %v887, 16
        %v952 = vrot.slane %v950, 5
        %v953 = vsel %vm351, %v948, %v952
        %v955 = vshrl.u32 %v888, 16
        %v957 = vrot.slane %v955, 4
        %v958 = vshll.u32 %v888, 16
        %v960 = vrot.slane %v958, 5
        %v961 = vor.u32 %v957, %v960
        %v962 = vrot.slane %v961, 4
        %v964 = vshll.u32 %v889, 16
        %v966 = vrot.slane %v964, 5
        %v967 = vsel %vm351, %v962, %v966
        %v968 = vshrl.u32 %v889, 16
        %v970 = vrot.slane %v968, 4
        %v971 = vor.u32 %v970, %v966
        %v972 = vrot.slane %v971, 4
        %v974 = vshll.u32 %v890, 16
        %v976 = vrot.slane %v974, 5
        %v977 = vsel %vm351, %v972, %v976
        %v979 = vshrl.u32 %v891, 16
        %v981 = vrot.slane %v979, 4
        %v982 = vshll.u32 %v891, 16
        %v984 = vrot.slane %v982, 5
        %v985 = vor.u32 %v981, %v984
        %v986 = vrot.slane %v985, 4
        %v988 = vshll.u32 %v892, 16
        %v990 = vrot.slane %v988, 5
        %v991 = vsel %vm351, %v986, %v990
        %v992 = vshrl.u32 %v892, 16
        %v994 = vrot.slane %v992, 4
        %v995 = vor.u32 %v994, %v990
        %v996 = vrot.slane %v995, 4
        %v998 = vshll.u32 %v893, 16
        %v1000 = vrot.slane %v998, 5
        %v1001 = vsel %vm351, %v996, %v1000
        %v1003 = vshrl.u32 %v894, 16
        %v1005 = vrot.slane %v1003, 4
        %v1006 = vshll.u32 %v894, 16
        %v1008 = vrot.slane %v1006, 5
        %v1009 = vor.u32 %v1005, %v1008
        %v1010 = vrot.slane %v1009, 4
        %v1012 = vshll.u32 %v895, 16
        %v1014 = vrot.slane %v1012, 5
        %v1015 = vsel %vm351, %v1010, %v1014
        %v1016 = vshrl.u32 %v895, 16
        %v1018 = vrot.slane %v1016, 4
        %v1019 = vor.u32 %v1018, %v1014
        %v1020 = vrot.slane %v1019, 4
        %v1022 = vshll.u32 %v896, 16
        %v1024 = vrot.slane %v1022, 5
        %v1025 = vsel %vm351, %v1020, %v1024
        %v1027 = vshrl.u32 %v897, 16
        %v1029 = vrot.slane %v1027, 4
        %v1030 = vshll.u32 %v897, 16
        %v1032 = vrot.slane %v1030, 5
        %v1033 = vor.u32 %v1029, %v1032
        %v1034 = vrot.slane %v1033, 4
        %v1036 = vshll.u32 %v898, 16
        %v1038 = vrot.slane %v1036, 5
        %v1039 = vsel %vm351, %v1034, %v1038
        %v1040 = vshrl.u32 %v898, 16
        %v1042 = vrot.slane %v1040, 4
        %v1043 = vor.u32 %v1042, %v1038
        %v1044 = vrot.slane %v1043, 4
        %v1046 = vshll.u32 %v899, 16
        %v1048 = vrot.slane %v1046, 5
        %v1049 = vsel %vm351, %v1044, %v1048
        %v1051 = vshrl.u32 %v900, 16
        %v1053 = vrot.slane %v1051, 4
        %v1054 = vshll.u32 %v900, 16
        %v1056 = vrot.slane %v1054, 5
        %v1057 = vor.u32 %v1053, %v1056
        %v1058 = vrot.slane %v1057, 4
        %v1060 = vshll.u32 %v901, 16
        %v1062 = vrot.slane %v1060, 5
        %v1063 = vsel %vm351, %v1058, %v1062
        %v1064 = vshrl.u32 %v901, 16
        %v1066 = vrot.slane %v1064, 4
        %v1067 = vor.u32 %v1066, %v1062
        %v1068 = vrot.slane %v1067, 4
        %v1070 = vshll.u32 %v902, 16
        %v1072 = vrot.slane %v1070, 5
        %v1073 = vsel %vm351, %v1068, %v1072
        %v1075 = vshrl.u32 %v903, 16
        %v1077 = vrot.slane %v1075, 4
        %v1078 = vshll.u32 %v903, 16
        %v1080 = vrot.slane %v1078, 5
        %v1081 = vor.u32 %v1077, %v1080
        %v1082 = vrot.slane %v1081, 4
        %v1084 = vshll.u32 %v904, 16
        %v1086 = vrot.slane %v1084, 5
        %v1087 = vsel %vm351, %v1082, %v1086
        %v1088 = vshrl.u32 %v904, 16
        %v1090 = vrot.slane %v1088, 4
        %v1091 = vor.u32 %v1090, %v1086
        %v1092 = vrot.slane %v1091, 4
        %v1094 = vshll.u32 %v905, 16
        %v1096 = vrot.slane %v1094, 5
        %v1097 = vsel %vm351, %v1092, %v1096
        %1098 = vrot.lane.b32.xlu0 %v919, 16
        %v1099 = vpop.permute.xlu0 %1098
        %1100 = vrot.lane.b32.xlu0 %v929, 16
        %v1101 = vpop.permute.xlu0 %1100
        %1102 = vrot.lane.b32.xlu0 %v943, 16
        %v1103 = vpop.permute.xlu0 %1102
        %1104 = vrot.lane.b32.xlu0 %v953, 16
        %v1105 = vpop.permute.xlu0 %1104
        %1106 = vrot.lane.b32.xlu0 %v967, 16
        %v1107 = vpop.permute.xlu0 %1106
        %1108 = vrot.lane.b32.xlu0 %v977, 16
        %v1109 = vpop.permute.xlu0 %1108
        %1110 = vrot.lane.b32.xlu0 %v991, 16
        %v1111 = vpop.permute.xlu0 %1110
        %1112 = vrot.lane.b32.xlu0 %v1001, 16
        %v1113 = vpop.permute.xlu0 %1112
        %1114 = vrot.lane.b32.xlu0 %v1015, 16
        %v1115 = vpop.permute.xlu0 %1114
        %1116 = vrot.lane.b32.xlu0 %v1025, 16
        %v1117 = vpop.permute.xlu0 %1116
        %1118 = vrot.lane.b32.xlu0 %v1039, 16
        %v1119 = vpop.permute.xlu0 %1118
        %1120 = vrot.lane.b32.xlu0 %v1049, 16
        %v1121 = vpop.permute.xlu0 %1120
        %1122 = vrot.lane.b32.xlu0 %v1063, 16
        %v1123 = vpop.permute.xlu0 %1122
        %1124 = vrot.lane.b32.xlu0 %v1073, 16
        %v1125 = vpop.permute.xlu0 %1124
        %1126 = vrot.lane.b32.xlu0 %v1087, 16
        %v1127 = vpop.permute.xlu0 %1126
        %1128 = vrot.lane.b32.xlu0 %v1097, 16
        %v1129 = vpop.permute.xlu0 %1128
        %vm1146 = vcmask 158848
        %1147 = vst.msk [vmem:[#allocation2] sm:$0xf] %vm1146, %v1099
        %1148 = vst.msk [vmem:[#allocation2 + $0x4] sm:$0xf] %vm1146, %v1101
        %1149 = vst.msk [vmem:[#allocation2 + $0x8] sm:$0xf] %vm1146, %v1103
        %1150 = vst.msk [vmem:[#allocation2 + $0xc] sm:$0xf] %vm1146, %v1105
        %1151 = vst.msk [vmem:[#allocation2 + $0x10] sm:$0xf] %vm1146, %v1107
        %1152 = vst.msk [vmem:[#allocation2 + $0x14] sm:$0xf] %vm1146, %v1109
        %1153 = vst.msk [vmem:[#allocation2 + $0x18] sm:$0xf] %vm1146, %v1111
        %1154 = vst.msk [vmem:[#allocation2 + $0x1c] sm:$0xf] %vm1146, %v1113
        %1155 = vst.msk [vmem:[#allocation2 + $0x20] sm:$0xf] %vm1146, %v1115
        %1156 = vst.msk [vmem:[#allocation2 + $0x24] sm:$0xf] %vm1146, %v1117
        %1157 = vst.msk [vmem:[#allocation2 + $0x28] sm:$0xf] %vm1146, %v1119
        %1158 = vst.msk [vmem:[#allocation2 + $0x2c] sm:$0xf] %vm1146, %v1121
        %1159 = vst.msk [vmem:[#allocation2 + $0x30] sm:$0xf] %vm1146, %v1123
        %1160 = vst.msk [vmem:[#allocation2 + $0x34] sm:$0xf] %vm1146, %v1125
        %1161 = vst.msk [vmem:[#allocation2 + $0x38] sm:$0xf] %vm1146, %v1127
        %1162 = vst.msk [vmem:[#allocation2 + $0x3c] sm:$0xf] %vm1146, %v1129
        %v1163 = vld [vmem:[%s784] sm:$0xe]
        %v1164 = vld [vmem:[%s784 + $0x4] sm:$0xf]
        %v1165 = vld [vmem:[%s784 + $0x8] sm:$0x1]
        %v1166 = vld [vmem:[%s784 + $0xc] sm:$0xe]
        %v1167 = vld [vmem:[%s784 + $0x10] sm:$0xf]
        %v1168 = vld [vmem:[%s784 + $0x14] sm:$0x1]
        %v1169 = vld [vmem:[%s784 + $0x18] sm:$0xe]
        %v1170 = vld [vmem:[%s784 + $0x1c] sm:$0xf]
        %v1171 = vld [vmem:[%s784 + $0x20] sm:$0x1]
        %v1172 = vld [vmem:[%s784 + $0x24] sm:$0xe]
        %v1173 = vld [vmem:[%s784 + $0x28] sm:$0xf]
        %v1174 = vld [vmem:[%s784 + $0x2c] sm:$0x1]
        %v1175 = vld [vmem:[%s784 + $0x30] sm:$0xe]
        %v1176 = vld [vmem:[%s784 + $0x34] sm:$0xf]
        %v1177 = vld [vmem:[%s784 + $0x38] sm:$0x1]
        %v1178 = vld [vmem:[%s784 + $0x3c] sm:$0xe]
        %v1179 = vld [vmem:[%s784 + $0x40] sm:$0xf]
        %v1180 = vld [vmem:[%s784 + $0x44] sm:$0x1]
        %v1181 = vld [vmem:[%s784 + $0x48] sm:$0xe]
        %v1182 = vld [vmem:[%s784 + $0x4c] sm:$0xf]
        %v1183 = vld [vmem:[%s784 + $0x50] sm:$0x1]
        %v1184 = vld [vmem:[%s784 + $0x54] sm:$0xe]
        %v1185 = vld [vmem:[%s784 + $0x58] sm:$0xf]
        %v1186 = vld [vmem:[%s784 + $0x5c] sm:$0x1]
        %v1211 = vrot.slane %v1163, 5
        %v1212 = vrot.slane %v1211, 4
        %v1213 = vrot.slane %v1164, 5
        %v1214 = vsel %vm659, %v1212, %v1213
        %v1215 = vrot.slane %v1213, 4
        %v1216 = vrot.slane %v1165, 5
        %v1217 = vsel %vm659, %v1215, %v1216
        %v1218 = vrot.slane %v1166, 5
        %v1219 = vrot.slane %v1218, 4
        %v1220 = vrot.slane %v1167, 5
        %v1221 = vsel %vm659, %v1219, %v1220
        %v1222 = vrot.slane %v1220, 4
        %v1223 = vrot.slane %v1168, 5
        %v1224 = vsel %vm659, %v1222, %v1223
        %v1225 = vrot.slane %v1169, 5
        %v1226 = vrot.slane %v1225, 4
        %v1227 = vrot.slane %v1170, 5
        %v1228 = vsel %vm659, %v1226, %v1227
        %v1229 = vrot.slane %v1227, 4
        %v1230 = vrot.slane %v1171, 5
        %v1231 = vsel %vm659, %v1229, %v1230
        %v1232 = vrot.slane %v1172, 5
        %v1233 = vrot.slane %v1232, 4
        %v1234 = vrot.slane %v1173, 5
        %v1235 = vsel %vm659, %v1233, %v1234
        %v1236 = vrot.slane %v1234, 4
        %v1237 = vrot.slane %v1174, 5
        %v1238 = vsel %vm659, %v1236, %v1237
        %v1239 = vrot.slane %v1175, 5
        %v1240 = vrot.slane %v1239, 4
        %v1241 = vrot.slane %v1176, 5
        %v1242 = vsel %vm659, %v1240, %v1241
        %v1243 = vrot.slane %v1241, 4
        %v1244 = vrot.slane %v1177, 5
        %v1245 = vsel %vm659, %v1243, %v1244
        %v1246 = vrot.slane %v1178, 5
        %v1247 = vrot.slane %v1246, 4
        %v1248 = vrot.slane %v1179, 5
        %v1249 = vsel %vm659, %v1247, %v1248
        %v1250 = vrot.slane %v1248, 4
        %v1251 = vrot.slane %v1180, 5
        %v1252 = vsel %vm659, %v1250, %v1251
        %v1253 = vrot.slane %v1181, 5
        %v1254 = vrot.slane %v1253, 4
        %v1255 = vrot.slane %v1182, 5
        %v1256 = vsel %vm659, %v1254, %v1255
        %v1257 = vrot.slane %v1255, 4
        %v1258 = vrot.slane %v1183, 5
        %v1259 = vsel %vm659, %v1257, %v1258
        %v1260 = vrot.slane %v1184, 5
        %v1261 = vrot.slane %v1260, 4
        %v1262 = vrot.slane %v1185, 5
        %v1263 = vsel %vm659, %v1261, %v1262
        %v1264 = vrot.slane %v1262, 4
        %v1265 = vrot.slane %v1186, 5
        %v1266 = vsel %vm659, %v1264, %v1265
        %1267 = vrot.lane.b32.xlu0 %v1214, 20
        %v1268 = vpop.permute.xlu0 %1267
        %1269 = vrot.lane.b32.xlu0 %v1217, 20
        %v1270 = vpop.permute.xlu0 %1269
        %1271 = vrot.lane.b32.xlu0 %v1221, 20
        %v1272 = vpop.permute.xlu0 %1271
        %1273 = vrot.lane.b32.xlu0 %v1224, 20
        %v1274 = vpop.permute.xlu0 %1273
        %1275 = vrot.lane.b32.xlu0 %v1228, 20
        %v1276 = vpop.permute.xlu0 %1275
        %1277 = vrot.lane.b32.xlu0 %v1231, 20
        %v1278 = vpop.permute.xlu0 %1277
        %1279 = vrot.lane.b32.xlu0 %v1235, 20
        %v1280 = vpop.permute.xlu0 %1279
        %1281 = vrot.lane.b32.xlu0 %v1238, 20
        %v1282 = vpop.permute.xlu0 %1281
        %1283 = vrot.lane.b32.xlu0 %v1242, 20
        %v1284 = vpop.permute.xlu0 %1283
        %1285 = vrot.lane.b32.xlu0 %v1245, 20
        %v1286 = vpop.permute.xlu0 %1285
        %1287 = vrot.lane.b32.xlu0 %v1249, 20
        %v1288 = vpop.permute.xlu0 %1287
        %1289 = vrot.lane.b32.xlu0 %v1252, 20
        %v1290 = vpop.permute.xlu0 %1289
        %1291 = vrot.lane.b32.xlu0 %v1256, 20
        %v1292 = vpop.permute.xlu0 %1291
        %1293 = vrot.lane.b32.xlu0 %v1259, 20
        %v1294 = vpop.permute.xlu0 %1293
        %1295 = vrot.lane.b32.xlu0 %v1263, 20
        %v1296 = vpop.permute.xlu0 %1295
        %1297 = vrot.lane.b32.xlu0 %v1266, 20
        %v1298 = vpop.permute.xlu0 %1297
        %vm1315 = vcmask 191648
        %1316 = vst.msk [vmem:[#allocation2] sm:$0xf] %vm1315, %v1268
        %1317 = vst.msk [vmem:[#allocation2 + $0x4] sm:$0xf] %vm1315, %v1270
        %1318 = vst.msk [vmem:[#allocation2 + $0x8] sm:$0xf] %vm1315, %v1272
        %1319 = vst.msk [vmem:[#allocation2 + $0xc] sm:$0xf] %vm1315, %v1274
        %1320 = vst.msk [vmem:[#allocation2 + $0x10] sm:$0xf] %vm1315, %v1276
        %1321 = vst.msk [vmem:[#allocation2 + $0x14] sm:$0xf] %vm1315, %v1278
        %1322 = vst.msk [vmem:[#allocation2 + $0x18] sm:$0xf] %vm1315, %v1280
        %1323 = vst.msk [vmem:[#allocation2 + $0x1c] sm:$0xf] %vm1315, %v1282
        %1324 = vst.msk [vmem:[#allocation2 + $0x20] sm:$0xf] %vm1315, %v1284
        %1325 = vst.msk [vmem:[#allocation2 + $0x24] sm:$0xf] %vm1315, %v1286
        %1326 = vst.msk [vmem:[#allocation2 + $0x28] sm:$0xf] %vm1315, %v1288
        %1327 = vst.msk [vmem:[#allocation2 + $0x2c] sm:$0xf] %vm1315, %v1290
        %1328 = vst.msk [vmem:[#allocation2 + $0x30] sm:$0xf] %vm1315, %v1292
        %1329 = vst.msk [vmem:[#allocation2 + $0x34] sm:$0xf] %vm1315, %v1294
        %1330 = vst.msk [vmem:[#allocation2 + $0x38] sm:$0xf] %vm1315, %v1296
        %1331 = vst.msk [vmem:[#allocation2 + $0x3c] sm:$0xf] %vm1315, %v1298
        %s1332 = sadd.s32 %s288, 2
        %s1333 = smul.u32 %s1332, 3
        %s1334 = smul.addr %s1333, 4
        %s1335 = scalar_lea.vmem %s258, %s1334
        %v1336 = vld [vmem:[%s1335] sm:$0xf]
        %v1337 = vld [vmem:[%s1335 + $0x4] sm:$0xf]
        %v1338 = vld [vmem:[%s1335 + $0xc] sm:$0xf]
        %v1339 = vld [vmem:[%s1335 + $0x10] sm:$0xf]
        %v1340 = vld [vmem:[%s1335 + $0x18] sm:$0xf]
        %v1341 = vld [vmem:[%s1335 + $0x1c] sm:$0xf]
        %v1342 = vld [vmem:[%s1335 + $0x24] sm:$0xf]
        %v1343 = vld [vmem:[%s1335 + $0x28] sm:$0xf]
        %v1344 = vld [vmem:[%s1335 + $0x30] sm:$0xf]
        %v1345 = vld [vmem:[%s1335 + $0x34] sm:$0xf]
        %v1346 = vld [vmem:[%s1335 + $0x3c] sm:$0xf]
        %v1347 = vld [vmem:[%s1335 + $0x40] sm:$0xf]
        %v1348 = vld [vmem:[%s1335 + $0x48] sm:$0xf]
        %v1349 = vld [vmem:[%s1335 + $0x4c] sm:$0xf]
        %v1350 = vld [vmem:[%s1335 + $0x54] sm:$0xf]
        %v1351 = vld [vmem:[%s1335 + $0x58] sm:$0xf]
        %1368 = vrot.lane.b32.xlu0 %v1336, 24
        %v1369 = vpop.permute.xlu0 %1368
        %1370 = vrot.lane.b32.xlu0 %v1337, 24
        %v1371 = vpop.permute.xlu0 %1370
        %1372 = vrot.lane.b32.xlu0 %v1338, 24
        %v1373 = vpop.permute.xlu0 %1372
        %1374 = vrot.lane.b32.xlu0 %v1339, 24
        %v1375 = vpop.permute.xlu0 %1374
        %1376 = vrot.lane.b32.xlu0 %v1340, 24
        %v1377 = vpop.permute.xlu0 %1376
        %1378 = vrot.lane.b32.xlu0 %v1341, 24
        %v1379 = vpop.permute.xlu0 %1378
        %1380 = vrot.lane.b32.xlu0 %v1342, 24
        %v1381 = vpop.permute.xlu0 %1380
        %1382 = vrot.lane.b32.xlu0 %v1343, 24
        %v1383 = vpop.permute.xlu0 %1382
        %1384 = vrot.lane.b32.xlu0 %v1344, 24
        %v1385 = vpop.permute.xlu0 %1384
        %1386 = vrot.lane.b32.xlu0 %v1345, 24
        %v1387 = vpop.permute.xlu0 %1386
        %1388 = vrot.lane.b32.xlu0 %v1346, 24
        %v1389 = vpop.permute.xlu0 %1388
        %1390 = vrot.lane.b32.xlu0 %v1347, 24
        %v1391 = vpop.permute.xlu0 %1390
        %1392 = vrot.lane.b32.xlu0 %v1348, 24
        %v1393 = vpop.permute.xlu0 %1392
        %1394 = vrot.lane.b32.xlu0 %v1349, 24
        %v1395 = vpop.permute.xlu0 %1394
        %1396 = vrot.lane.b32.xlu0 %v1350, 24
        %v1397 = vpop.permute.xlu0 %1396
        %1398 = vrot.lane.b32.xlu0 %v1351, 24
        %v1399 = vpop.permute.xlu0 %1398
        %vm1416 = vcmask 224448
        %1417 = vst.msk [vmem:[#allocation2] sm:$0xf] %vm1416, %v1369
        %1418 = vst.msk [vmem:[#allocation2 + $0x4] sm:$0xf] %vm1416, %v1371
        %1419 = vst.msk [vmem:[#allocation2 + $0x8] sm:$0xf] %vm1416, %v1373
        %1420 = vst.msk [vmem:[#allocation2 + $0xc] sm:$0xf] %vm1416, %v1375
        %1421 = vst.msk [vmem:[#allocation2 + $0x10] sm:$0xf] %vm1416, %v1377
        %1422 = vst.msk [vmem:[#allocation2 + $0x14] sm:$0xf] %vm1416, %v1379
        %1423 = vst.msk [vmem:[#allocation2 + $0x18] sm:$0xf] %vm1416, %v1381
        %1424 = vst.msk [vmem:[#allocation2 + $0x1c] sm:$0xf] %vm1416, %v1383
        %1425 = vst.msk [vmem:[#allocation2 + $0x20] sm:$0xf] %vm1416, %v1385
        %1426 = vst.msk [vmem:[#allocation2 + $0x24] sm:$0xf] %vm1416, %v1387
        %1427 = vst.msk [vmem:[#allocation2 + $0x28] sm:$0xf] %vm1416, %v1389
        %1428 = vst.msk [vmem:[#allocation2 + $0x2c] sm:$0xf] %vm1416, %v1391
        %1429 = vst.msk [vmem:[#allocation2 + $0x30] sm:$0xf] %vm1416, %v1393
        %1430 = vst.msk [vmem:[#allocation2 + $0x34] sm:$0xf] %vm1416, %v1395
        %1431 = vst.msk [vmem:[#allocation2 + $0x38] sm:$0xf] %vm1416, %v1397
        %1432 = vst.msk [vmem:[#allocation2 + $0x3c] sm:$0xf] %vm1416, %v1399
        %v1433 = vld [vmem:[%s1335] sm:$0xf]
        %v1434 = vld [vmem:[%s1335 + $0x4] sm:$0xf]
        %v1435 = vld [vmem:[%s1335 + $0x8] sm:$0x1]
        %v1436 = vld [vmem:[%s1335 + $0xc] sm:$0xf]
        %v1437 = vld [vmem:[%s1335 + $0x10] sm:$0xf]
        %v1438 = vld [vmem:[%s1335 + $0x14] sm:$0x1]
        %v1439 = vld [vmem:[%s1335 + $0x18] sm:$0xf]
        %v1440 = vld [vmem:[%s1335 + $0x1c] sm:$0xf]
        %v1441 = vld [vmem:[%s1335 + $0x20] sm:$0x1]
        %v1442 = vld [vmem:[%s1335 + $0x24] sm:$0xf]
        %v1443 = vld [vmem:[%s1335 + $0x28] sm:$0xf]
        %v1444 = vld [vmem:[%s1335 + $0x2c] sm:$0x1]
        %v1445 = vld [vmem:[%s1335 + $0x30] sm:$0xf]
        %v1446 = vld [vmem:[%s1335 + $0x34] sm:$0xf]
        %v1447 = vld [vmem:[%s1335 + $0x38] sm:$0x1]
        %v1448 = vld [vmem:[%s1335 + $0x3c] sm:$0xf]
        %v1449 = vld [vmem:[%s1335 + $0x40] sm:$0xf]
        %v1450 = vld [vmem:[%s1335 + $0x44] sm:$0x1]
        %v1451 = vld [vmem:[%s1335 + $0x48] sm:$0xf]
        %v1452 = vld [vmem:[%s1335 + $0x4c] sm:$0xf]
        %v1453 = vld [vmem:[%s1335 + $0x50] sm:$0x1]
        %v1454 = vld [vmem:[%s1335 + $0x54] sm:$0xf]
        %v1455 = vld [vmem:[%s1335 + $0x58] sm:$0xf]
        %v1456 = vld [vmem:[%s1335 + $0x5c] sm:$0x1]
        %v1458 = vshrl.u32 %v1433, 16
        %v1460 = vrot.slane %v1458, 4
        %v1461 = vshll.u32 %v1433, 16
        %v1463 = vrot.slane %v1461, 5
        %v1464 = vor.u32 %v1460, %v1463
        %v1465 = vrot.slane %v1464, 4
        %v1467 = vshll.u32 %v1434, 16
        %v1469 = vrot.slane %v1467, 5
        %v1470 = vsel %vm351, %v1465, %v1469
        %v1471 = vshrl.u32 %v1434, 16
        %v1473 = vrot.slane %v1471, 4
        %v1474 = vor.u32 %v1473, %v1469
        %v1475 = vrot.slane %v1474, 4
        %v1477 = vshll.u32 %v1435, 16
        %v1479 = vrot.slane %v1477, 5
        %v1480 = vsel %vm351, %v1475, %v1479
        %v1482 = vshrl.u32 %v1436, 16
        %v1484 = vrot.slane %v1482, 4
        %v1485 = vshll.u32 %v1436, 16
        %v1487 = vrot.slane %v1485, 5
        %v1488 = vor.u32 %v1484, %v1487
        %v1489 = vrot.slane %v1488, 4
        %v1491 = vshll.u32 %v1437, 16
        %v1493 = vrot.slane %v1491, 5
        %v1494 = vsel %vm351, %v1489, %v1493
        %v1495 = vshrl.u32 %v1437, 16
        %v1497 = vrot.slane %v1495, 4
        %v1498 = vor.u32 %v1497, %v1493
        %v1499 = vrot.slane %v1498, 4
        %v1501 = vshll.u32 %v1438, 16
        %v1503 = vrot.slane %v1501, 5
        %v1504 = vsel %vm351, %v1499, %v1503
        %v1506 = vshrl.u32 %v1439, 16
        %v1508 = vrot.slane %v1506, 4
        %v1509 = vshll.u32 %v1439, 16
        %v1511 = vrot.slane %v1509, 5
        %v1512 = vor.u32 %v1508, %v1511
        %v1513 = vrot.slane %v1512, 4
        %v1515 = vshll.u32 %v1440, 16
        %v1517 = vrot.slane %v1515, 5
        %v1518 = vsel %vm351, %v1513, %v1517
        %v1519 = vshrl.u32 %v1440, 16
        %v1521 = vrot.slane %v1519, 4
        %v1522 = vor.u32 %v1521, %v1517
        %v1523 = vrot.slane %v1522, 4
        %v1525 = vshll.u32 %v1441, 16
        %v1527 = vrot.slane %v1525, 5
        %v1528 = vsel %vm351, %v1523, %v1527
        %v1530 = vshrl.u32 %v1442, 16
        %v1532 = vrot.slane %v1530, 4
        %v1533 = vshll.u32 %v1442, 16
        %v1535 = vrot.slane %v1533, 5
        %v1536 = vor.u32 %v1532, %v1535
        %v1537 = vrot.slane %v1536, 4
        %v1539 = vshll.u32 %v1443, 16
        %v1541 = vrot.slane %v1539, 5
        %v1542 = vsel %vm351, %v1537, %v1541
        %v1543 = vshrl.u32 %v1443, 16
        %v1545 = vrot.slane %v1543, 4
        %v1546 = vor.u32 %v1545, %v1541
        %v1547 = vrot.slane %v1546, 4
        %v1549 = vshll.u32 %v1444, 16
        %v1551 = vrot.slane %v1549, 5
        %v1552 = vsel %vm351, %v1547, %v1551
        %v1554 = vshrl.u32 %v1445, 16
        %v1556 = vrot.slane %v1554, 4
        %v1557 = vshll.u32 %v1445, 16
        %v1559 = vrot.slane %v1557, 5
        %v1560 = vor.u32 %v1556, %v1559
        %v1561 = vrot.slane %v1560, 4
        %v1563 = vshll.u32 %v1446, 16
        %v1565 = vrot.slane %v1563, 5
        %v1566 = vsel %vm351, %v1561, %v1565
        %v1567 = vshrl.u32 %v1446, 16
        %v1569 = vrot.slane %v1567, 4
        %v1570 = vor.u32 %v1569, %v1565
        %v1571 = vrot.slane %v1570, 4
        %v1573 = vshll.u32 %v1447, 16
        %v1575 = vrot.slane %v1573, 5
        %v1576 = vsel %vm351, %v1571, %v1575
        %v1578 = vshrl.u32 %v1448, 16
        %v1580 = vrot.slane %v1578, 4
        %v1581 = vshll.u32 %v1448, 16
        %v1583 = vrot.slane %v1581, 5
        %v1584 = vor.u32 %v1580, %v1583
        %v1585 = vrot.slane %v1584, 4
        %v1587 = vshll.u32 %v1449, 16
        %v1589 = vrot.slane %v1587, 5
        %v1590 = vsel %vm351, %v1585, %v1589
        %v1591 = vshrl.u32 %v1449, 16
        %v1593 = vrot.slane %v1591, 4
        %v1594 = vor.u32 %v1593, %v1589
        %v1595 = vrot.slane %v1594, 4
        %v1597 = vshll.u32 %v1450, 16
        %v1599 = vrot.slane %v1597, 5
        %v1600 = vsel %vm351, %v1595, %v1599
        %v1602 = vshrl.u32 %v1451, 16
        %v1604 = vrot.slane %v1602, 4
        %v1605 = vshll.u32 %v1451, 16
        %v1607 = vrot.slane %v1605, 5
        %v1608 = vor.u32 %v1604, %v1607
        %v1609 = vrot.slane %v1608, 4
        %v1611 = vshll.u32 %v1452, 16
        %v1613 = vrot.slane %v1611, 5
        %v1614 = vsel %vm351, %v1609, %v1613
        %v1615 = vshrl.u32 %v1452, 16
        %v1617 = vrot.slane %v1615, 4
        %v1618 = vor.u32 %v1617, %v1613
        %v1619 = vrot.slane %v1618, 4
        %v1621 = vshll.u32 %v1453, 16
        %v1623 = vrot.slane %v1621, 5
        %v1624 = vsel %vm351, %v1619, %v1623
        %v1626 = vshrl.u32 %v1454, 16
        %v1628 = vrot.slane %v1626, 4
        %v1629 = vshll.u32 %v1454, 16
        %v1631 = vrot.slane %v1629, 5
        %v1632 = vor.u32 %v1628, %v1631
        %v1633 = vrot.slane %v1632, 4
        %v1635 = vshll.u32 %v1455, 16
        %v1637 = vrot.slane %v1635, 5
        %v1638 = vsel %vm351, %v1633, %v1637
        %v1639 = vshrl.u32 %v1455, 16
        %v1641 = vrot.slane %v1639, 4
        %v1642 = vor.u32 %v1641, %v1637
        %v1643 = vrot.slane %v1642, 4
        %v1645 = vshll.u32 %v1456, 16
        %v1647 = vrot.slane %v1645, 5
        %v1648 = vsel %vm351, %v1643, %v1647
        %1649 = vrot.lane.b32.xlu0 %v1470, 28
        %v1650 = vpop.permute.xlu0 %1649
        %1651 = vrot.lane.b32.xlu0 %v1480, 28
        %v1652 = vpop.permute.xlu0 %1651
        %1653 = vrot.lane.b32.xlu0 %v1494, 28
        %v1654 = vpop.permute.xlu0 %1653
        %1655 = vrot.lane.b32.xlu0 %v1504, 28
        %v1656 = vpop.permute.xlu0 %1655
        %1657 = vrot.lane.b32.xlu0 %v1518, 28
        %v1658 = vpop.permute.xlu0 %1657
        %1659 = vrot.lane.b32.xlu0 %v1528, 28
        %v1660 = vpop.permute.xlu0 %1659
        %1661 = vrot.lane.b32.xlu0 %v1542, 28
        %v1662 = vpop.permute.xlu0 %1661
        %1663 = vrot.lane.b32.xlu0 %v1552, 28
        %v1664 = vpop.permute.xlu0 %1663
        %1665 = vrot.lane.b32.xlu0 %v1566, 28
        %v1666 = vpop.permute.xlu0 %1665
        %1667 = vrot.lane.b32.xlu0 %v1576, 28
        %v1668 = vpop.permute.xlu0 %1667
        %1669 = vrot.lane.b32.xlu0 %v1590, 28
        %v1670 = vpop.permute.xlu0 %1669
        %1671 = vrot.lane.b32.xlu0 %v1600, 28
        %v1672 = vpop.permute.xlu0 %1671
        %1673 = vrot.lane.b32.xlu0 %v1614, 28
        %v1674 = vpop.permute.xlu0 %1673
        %1675 = vrot.lane.b32.xlu0 %v1624, 28
        %v1676 = vpop.permute.xlu0 %1675
        %1677 = vrot.lane.b32.xlu0 %v1638, 28
        %v1678 = vpop.permute.xlu0 %1677
        %1679 = vrot.lane.b32.xlu0 %v1648, 28
        %v1680 = vpop.permute.xlu0 %1679
        %vm1697 = vcmask 257248
        %1698 = vst.msk [vmem:[#allocation2] sm:$0xf] %vm1697, %v1650
        %1699 = vst.msk [vmem:[#allocation2 + $0x4] sm:$0xf] %vm1697, %v1652
        %1700 = vst.msk [vmem:[#allocation2 + $0x8] sm:$0xf] %vm1697, %v1654
        %1701 = vst.msk [vmem:[#allocation2 + $0xc] sm:$0xf] %vm1697, %v1656
        %1702 = vst.msk [vmem:[#allocation2 + $0x10] sm:$0xf] %vm1697, %v1658
        %1703 = vst.msk [vmem:[#allocation2 + $0x14] sm:$0xf] %vm1697, %v1660
        %1704 = vst.msk [vmem:[#allocation2 + $0x18] sm:$0xf] %vm1697, %v1662
        %1705 = vst.msk [vmem:[#allocation2 + $0x1c] sm:$0xf] %vm1697, %v1664
        %1706 = vst.msk [vmem:[#allocation2 + $0x20] sm:$0xf] %vm1697, %v1666
        %1707 = vst.msk [vmem:[#allocation2 + $0x24] sm:$0xf] %vm1697, %v1668
        %1708 = vst.msk [vmem:[#allocation2 + $0x28] sm:$0xf] %vm1697, %v1670
        %1709 = vst.msk [vmem:[#allocation2 + $0x2c] sm:$0xf] %vm1697, %v1672
        %1710 = vst.msk [vmem:[#allocation2 + $0x30] sm:$0xf] %vm1697, %v1674
        %1711 = vst.msk [vmem:[#allocation2 + $0x34] sm:$0xf] %vm1697, %v1676
        %1712 = vst.msk [vmem:[#allocation2 + $0x38] sm:$0xf] %vm1697, %v1678
        %1713 = vst.msk [vmem:[#allocation2 + $0x3c] sm:$0xf] %vm1697, %v1680
        %v1714 = vld [vmem:[%s1335] sm:$0xe]
        %v1715 = vld [vmem:[%s1335 + $0x4] sm:$0xf]
        %v1716 = vld [vmem:[%s1335 + $0x8] sm:$0x1]
        %v1717 = vld [vmem:[%s1335 + $0xc] sm:$0xe]
        %v1718 = vld [vmem:[%s1335 + $0x10] sm:$0xf]
        %v1719 = vld [vmem:[%s1335 + $0x14] sm:$0x1]
        %v1720 = vld [vmem:[%s1335 + $0x18] sm:$0xe]
        %v1721 = vld [vmem:[%s1335 + $0x1c] sm:$0xf]
        %v1722 = vld [vmem:[%s1335 + $0x20] sm:$0x1]
        %v1723 = vld [vmem:[%s1335 + $0x24] sm:$0xe]
        %v1724 = vld [vmem:[%s1335 + $0x28] sm:$0xf]
        %v1725 = vld [vmem:[%s1335 + $0x2c] sm:$0x1]
        %v1726 = vld [vmem:[%s1335 + $0x30] sm:$0xe]
        %v1727 = vld [vmem:[%s1335 + $0x34] sm:$0xf]
        %v1728 = vld [vmem:[%s1335 + $0x38] sm:$0x1]
        %v1729 = vld [vmem:[%s1335 + $0x3c] sm:$0xe]
        %v1730 = vld [vmem:[%s1335 + $0x40] sm:$0xf]
        %v1731 = vld [vmem:[%s1335 + $0x44] sm:$0x1]
        %v1732 = vld [vmem:[%s1335 + $0x48] sm:$0xe]
        %v1733 = vld [vmem:[%s1335 + $0x4c] sm:$0xf]
        %v1734 = vld [vmem:[%s1335 + $0x50] sm:$0x1]
        %v1735 = vld [vmem:[%s1335 + $0x54] sm:$0xe]
        %v1736 = vld [vmem:[%s1335 + $0x58] sm:$0xf]
        %v1737 = vld [vmem:[%s1335 + $0x5c] sm:$0x1]
        %v1762 = vrot.slane %v1714, 5
        %v1763 = vrot.slane %v1762, 4
        %v1764 = vrot.slane %v1715, 5
        %v1765 = vsel %vm659, %v1763, %v1764
        %v1766 = vrot.slane %v1764, 4
        %v1767 = vrot.slane %v1716, 5
        %v1768 = vsel %vm659, %v1766, %v1767
        %v1769 = vrot.slane %v1717, 5
        %v1770 = vrot.slane %v1769, 4
        %v1771 = vrot.slane %v1718, 5
        %v1772 = vsel %vm659, %v1770, %v1771
        %v1773 = vrot.slane %v1771, 4
        %v1774 = vrot.slane %v1719, 5
        %v1775 = vsel %vm659, %v1773, %v1774
        %v1776 = vrot.slane %v1720, 5
        %v1777 = vrot.slane %v1776, 4
        %v1778 = vrot.slane %v1721, 5
        %v1779 = vsel %vm659, %v1777, %v1778
        %v1780 = vrot.slane %v1778, 4
        %v1781 = vrot.slane %v1722, 5
        %v1782 = vsel %vm659, %v1780, %v1781
        %v1783 = vrot.slane %v1723, 5
        %v1784 = vrot.slane %v1783, 4
        %v1785 = vrot.slane %v1724, 5
        %v1786 = vsel %vm659, %v1784, %v1785
        %v1787 = vrot.slane %v1785, 4
        %v1788 = vrot.slane %v1725, 5
        %v1789 = vsel %vm659, %v1787, %v1788
        %v1790 = vrot.slane %v1726, 5
        %v1791 = vrot.slane %v1790, 4
        %v1792 = vrot.slane %v1727, 5
        %v1793 = vsel %vm659, %v1791, %v1792
        %v1794 = vrot.slane %v1792, 4
        %v1795 = vrot.slane %v1728, 5
        %v1796 = vsel %vm659, %v1794, %v1795
        %v1797 = vrot.slane %v1729, 5
        %v1798 = vrot.slane %v1797, 4
        %v1799 = vrot.slane %v1730, 5
        %v1800 = vsel %vm659, %v1798, %v1799
        %v1801 = vrot.slane %v1799, 4
        %v1802 = vrot.slane %v1731, 5
        %v1803 = vsel %vm659, %v1801, %v1802
        %v1804 = vrot.slane %v1732, 5
        %v1805 = vrot.slane %v1804, 4
        %v1806 = vrot.slane %v1733, 5
        %v1807 = vsel %vm659, %v1805, %v1806
        %v1808 = vrot.slane %v1806, 4
        %v1809 = vrot.slane %v1734, 5
        %v1810 = vsel %vm659, %v1808, %v1809
        %v1811 = vrot.slane %v1735, 5
        %v1812 = vrot.slane %v1811, 4
        %v1813 = vrot.slane %v1736, 5
        %v1814 = vsel %vm659, %v1812, %v1813
        %v1815 = vrot.slane %v1813, 4
        %v1816 = vrot.slane %v1737, 5
        %v1817 = vsel %vm659, %v1815, %v1816
        %1818 = vrot.lane.b32.xlu0 %v1765, 32
        %v1819 = vpop.permute.xlu0 %1818
        %1820 = vrot.lane.b32.xlu0 %v1768, 32
        %v1821 = vpop.permute.xlu0 %1820
        %1822 = vrot.lane.b32.xlu0 %v1772, 32
        %v1823 = vpop.permute.xlu0 %1822
        %1824 = vrot.lane.b32.xlu0 %v1775, 32
        %v1825 = vpop.permute.xlu0 %1824
        %1826 = vrot.lane.b32.xlu0 %v1779, 32
        %v1827 = vpop.permute.xlu0 %1826
        %1828 = vrot.lane.b32.xlu0 %v1782, 32
        %v1829 = vpop.permute.xlu0 %1828
        %1830 = vrot.lane.b32.xlu0 %v1786, 32
        %v1831 = vpop.permute.xlu0 %1830
        %1832 = vrot.lane.b32.xlu0 %v1789, 32
        %v1833 = vpop.permute.xlu0 %1832
        %1834 = vrot.lane.b32.xlu0 %v1793, 32
        %v1835 = vpop.permute.xlu0 %1834
        %1836 = vrot.lane.b32.xlu0 %v1796, 32
        %v1837 = vpop.permute.xlu0 %1836
        %1838 = vrot.lane.b32.xlu0 %v1800, 32
        %v1839 = vpop.permute.xlu0 %1838
        %1840 = vrot.lane.b32.xlu0 %v1803, 32
        %v1841 = vpop.permute.xlu0 %1840
        %1842 = vrot.lane.b32.xlu0 %v1807, 32
        %v1843 = vpop.permute.xlu0 %1842
        %1844 = vrot.lane.b32.xlu0 %v1810, 32
        %v1845 = vpop.permute.xlu0 %1844
        %1846 = vrot.lane.b32.xlu0 %v1814, 32
        %v1847 = vpop.permute.xlu0 %1846
        %1848 = vrot.lane.b32.xlu0 %v1817, 32
        %v1849 = vpop.permute.xlu0 %1848
        %vm1866 = vcmask 290048
        %1867 = vst.msk [vmem:[#allocation2] sm:$0xf] %vm1866, %v1819
        %1868 = vst.msk [vmem:[#allocation2 + $0x4] sm:$0xf] %vm1866, %v1821
        %1869 = vst.msk [vmem:[#allocation2 + $0x8] sm:$0xf] %vm1866, %v1823
        %1870 = vst.msk [vmem:[#allocation2 + $0xc] sm:$0xf] %vm1866, %v1825
        %1871 = vst.msk [vmem:[#allocation2 + $0x10] sm:$0xf] %vm1866, %v1827
        %1872 = vst.msk [vmem:[#allocation2 + $0x14] sm:$0xf] %vm1866, %v1829
        %1873 = vst.msk [vmem:[#allocation2 + $0x18] sm:$0xf] %vm1866, %v1831
        %1874 = vst.msk [vmem:[#allocation2 + $0x1c] sm:$0xf] %vm1866, %v1833
        %1875 = vst.msk [vmem:[#allocation2 + $0x20] sm:$0xf] %vm1866, %v1835
        %1876 = vst.msk [vmem:[#allocation2 + $0x24] sm:$0xf] %vm1866, %v1837
        %1877 = vst.msk [vmem:[#allocation2 + $0x28] sm:$0xf] %vm1866, %v1839
        %1878 = vst.msk [vmem:[#allocation2 + $0x2c] sm:$0xf] %vm1866, %v1841
        %1879 = vst.msk [vmem:[#allocation2 + $0x30] sm:$0xf] %vm1866, %v1843
        %1880 = vst.msk [vmem:[#allocation2 + $0x34] sm:$0xf] %vm1866, %v1845
        %1881 = vst.msk [vmem:[#allocation2 + $0x38] sm:$0xf] %vm1866, %v1847
        %1882 = vst.msk [vmem:[#allocation2 + $0x3c] sm:$0xf] %vm1866, %v1849
      $region40: #{conv_bn_relu.1} parent=35 // pred_fallthru
        _
      %v1883 = vld [vmem:[#allocation2] sm:$0xf]
      %v1884 = vld [vmem:[#allocation2 + $0x4] sm:$0xf]
      %v1885 = vld [vmem:[#allocation2 + $0x8] sm:$0xf]
      %v1886 = vld [vmem:[#allocation2 + $0xc] sm:$0xf]
      %v1887 = vld [vmem:[#allocation2 + $0x10] sm:$0xf]
      %v1888 = vld [vmem:[#allocation2 + $0x14] sm:$0xf]
      %v1889 = vld [vmem:[#allocation2 + $0x18] sm:$0xf]
      %v1890 = vld [vmem:[#allocation2 + $0x1c] sm:$0xf]
      %v1891 = vld [vmem:[#allocation2 + $0x20] sm:$0xf]
      %v1892 = vld [vmem:[#allocation2 + $0x24] sm:$0xf]
      %v1893 = vld [vmem:[#allocation2 + $0x28] sm:$0xf]
      %v1894 = vld [vmem:[#allocation2 + $0x2c] sm:$0xf]
      %v1895 = vld [vmem:[#allocation2 + $0x30] sm:$0xf]
      %v1896 = vld [vmem:[#allocation2 + $0x34] sm:$0xf]
      %v1897 = vld [vmem:[#allocation2 + $0x38] sm:$0xf]
      %v1898 = vld [vmem:[#allocation2 + $0x3c] sm:$0xf]
      %v1899 = vld [vmem:[%s262] sm:$0xf]
      %v1900 = vld [vmem:[%s262 + $0x4] sm:$0xf]
      %v1901 = vld [vmem:[%s262 + $0x8] sm:$0xf]
      %v1902 = vld [vmem:[%s262 + $0xc] sm:$0xf]
      %v1903 = vld [vmem:[%s262 + $0x10] sm:$0x3]
      %v1920 = vunpack.c.l.b16 %v1883
      %v1921 = vunpack.c.l.b16 %v1884
      %v1922 = vunpack.c.l.b16 %v1885
      %v1923 = vunpack.c.l.b16 %v1886
      %v1924 = vunpack.c.l.b16 %v1887
      %v1925 = vunpack.c.l.b16 %v1888
      %v1926 = vunpack.c.l.b16 %v1889
      %v1927 = vunpack.c.l.b16 %v1890
      %v1928 = vunpack.c.l.b16 %v1891
      %v1929 = vunpack.c.l.b16 %v1892
      %v1930 = vunpack.c.l.b16 %v1893
      %v1931 = vunpack.c.l.b16 %v1894
      %v1932 = vunpack.c.l.b16 %v1895
      %v1933 = vunpack.c.l.b16 %v1896
      %v1934 = vunpack.c.l.b16 %v1897
      %v1935 = vunpack.c.l.b16 %v1898
      %v1936 = vpack.c.b16 %v1921, %v1920
      %v1937 = vpack.c.b16 %v1923, %v1922
      %v1938 = vpack.c.b16 %v1925, %v1924
      %v1939 = vpack.c.b16 %v1927, %v1926
      %v1940 = vpack.c.b16 %v1929, %v1928
      %v1941 = vpack.c.b16 %v1931, %v1930
      %v1942 = vpack.c.b16 %v1933, %v1932
      %v1943 = vpack.c.b16 %v1935, %v1934
      %v1949 = vunpack.c.l.b16 %v1899
      %v1950 = vunpack.c.l.b16 %v1900
      %v1951 = vunpack.c.l.b16 %v1901
      %v1952 = vunpack.c.l.b16 %v1902
      %v1953 = vunpack.c.l.b16 %v1903
      %v1954 = vpack.c.b16 %v1950, %v1949
      %v1955 = vpack.c.b16 %v1952, %v1951
      %v1956 = vpack.c.b16 %v1953, %v1953
      %vm1959 = vcmask 293888
      %v1961 = vsel %vm1959, %v1936, 0
      %v1964 = vsel %vm1959, %v1937, 0
      %v1967 = vsel %vm1959, %v1938, 0
      %v1970 = vsel %vm1959, %v1939, 0
      %v1973 = vsel %vm1959, %v1940, 0
      %v1976 = vsel %vm1959, %v1941, 0
      %v1979 = vsel %vm1959, %v1942, 0
      %v1982 = vsel %vm1959, %v1943, 0
      %vm1984 = vcmask 1041408
      %v1986 = vsel %vm1984, %v1956, 0
      %1988 = vmatpush.bf16.msra.mxu0 0
      %1989 = vmatpush.bf16.msra.mxu0 0
      %1990 = vmatpush.bf16.msra.mxu0 0
      %1991 = vmatpush.bf16.msra.mxu0 0
      %1992 = vmatpush.bf16.msra.mxu0 0
      %1993 = vmatpush.bf16.msra.mxu0 %v1986
      %1994 = vmatpush.bf16.msra.mxu0 %v1955
      %1995 = vmatpush.bf16.msra.mxu0 %v1954
      %1996 = vmatmul.bf16.gmra.mxu0 %v1961
      %v1997 = vpop.f32.mrf.mxu0
      %v1998 = vadd.f32 0.0, %v1997
      %v1999 = vpop.f32.mrf.mxu0
      %v2000 = vadd.f32 0.0, %v1999
      %2001 = vmatmul.bf16.gmra.mxu0 %v1964
      %v2002 = vpop.f32.mrf.mxu0
      %v2003 = vadd.f32 0.0, %v2002
      %v2004 = vpop.f32.mrf.mxu0
      %v2005 = vadd.f32 0.0, %v2004
      %2006 = vmatmul.bf16.gmra.mxu0 %v1967
      %v2007 = vpop.f32.mrf.mxu0
      %v2008 = vadd.f32 0.0, %v2007
      %v2009 = vpop.f32.mrf.mxu0
      %v2010 = vadd.f32 0.0, %v2009
      %2011 = vmatmul.bf16.gmra.mxu0 %v1970
      %v2012 = vpop.f32.mrf.mxu0
      %v2013 = vadd.f32 0.0, %v2012
      %v2014 = vpop.f32.mrf.mxu0
      %v2015 = vadd.f32 0.0, %v2014
      %2016 = vmatmul.bf16.gmra.mxu0 %v1973
      %v2017 = vpop.f32.mrf.mxu0
      %v2018 = vadd.f32 0.0, %v2017
      %v2019 = vpop.f32.mrf.mxu0
      %v2020 = vadd.f32 0.0, %v2019
      %2021 = vmatmul.bf16.gmra.mxu0 %v1976
      %v2022 = vpop.f32.mrf.mxu0
      %v2023 = vadd.f32 0.0, %v2022
      %v2024 = vpop.f32.mrf.mxu0
      %v2025 = vadd.f32 0.0, %v2024
      %2026 = vmatmul.bf16.gmra.mxu0 %v1979
      %v2027 = vpop.f32.mrf.mxu0
      %v2028 = vadd.f32 0.0, %v2027
      %v2029 = vpop.f32.mrf.mxu0
      %v2030 = vadd.f32 0.0, %v2029
      %2031 = vmatmul.bf16.gmra.mxu0 %v1982
      %v2032 = vpop.f32.mrf.mxu0
      %v2033 = vadd.f32 0.0, %v2032
      %v2034 = vpop.f32.mrf.mxu0
      %v2035 = vadd.f32 0.0, %v2034
      %2036 = vdwg.mxu0
      %v2037 = vld [vmem:[%s265] sm:$0x1]
      %v2039 = vperm.slane %v2037, 0
      %v2041 = vmul.f32 %v1998, %v2039
      %v2042 = vmul.f32 %v2000, %v2039
      %v2043 = vmul.f32 %v2003, %v2039
      %v2044 = vmul.f32 %v2005, %v2039
      %v2045 = vmul.f32 %v2008, %v2039
      %v2046 = vmul.f32 %v2010, %v2039
      %v2047 = vmul.f32 %v2013, %v2039
      %v2048 = vmul.f32 %v2015, %v2039
      %v2049 = vmul.f32 %v2018, %v2039
      %v2050 = vmul.f32 %v2020, %v2039
      %v2051 = vmul.f32 %v2023, %v2039
      %v2052 = vmul.f32 %v2025, %v2039
      %v2053 = vmul.f32 %v2028, %v2039
      %v2054 = vmul.f32 %v2030, %v2039
      %v2055 = vmul.f32 %v2033, %v2039
      %v2056 = vmul.f32 %v2035, %v2039
      %v2057 = vld [vmem:[%s268] sm:$0x1]
      %v2059 = vperm.slane %v2057, 0
      %v2061 = vadd.f32 %v2041, %v2059
      %v2062 = vadd.f32 %v2042, %v2059
      %v2063 = vadd.f32 %v2043, %v2059
      %v2064 = vadd.f32 %v2044, %v2059
      %v2065 = vadd.f32 %v2045, %v2059
      %v2066 = vadd.f32 %v2046, %v2059
      %v2067 = vadd.f32 %v2047, %v2059
      %v2068 = vadd.f32 %v2048, %v2059
      %v2069 = vadd.f32 %v2049, %v2059
      %v2070 = vadd.f32 %v2050, %v2059
      %v2071 = vadd.f32 %v2051, %v2059
      %v2072 = vadd.f32 %v2052, %v2059
      %v2073 = vadd.f32 %v2053, %v2059
      %v2074 = vadd.f32 %v2054, %v2059
      %v2075 = vadd.f32 %v2055, %v2059
      %v2076 = vadd.f32 %v2056, %v2059
      %v2077 = vmax.f32 %v2061, 0.0
      %v2078 = vmax.f32 %v2062, 0.0
      %v2079 = vmax.f32 %v2063, 0.0
      %v2080 = vmax.f32 %v2064, 0.0
      %v2081 = vmax.f32 %v2065, 0.0
      %v2082 = vmax.f32 %v2066, 0.0
      %v2083 = vmax.f32 %v2067, 0.0
      %v2084 = vmax.f32 %v2068, 0.0
      %v2085 = vmax.f32 %v2069, 0.0
      %v2086 = vmax.f32 %v2070, 0.0
      %v2087 = vmax.f32 %v2071, 0.0
      %v2088 = vmax.f32 %v2072, 0.0
      %v2089 = vmax.f32 %v2073, 0.0
      %v2090 = vmax.f32 %v2074, 0.0
      %v2091 = vmax.f32 %v2075, 0.0
      %v2092 = vmax.f32 %v2076, 0.0
      %2093 = vst [vmem:[%s281] sm:$0xff] %v2077
      %2094 = vst [vmem:[%s281 + $0x8] sm:$0xff] %v2078
      %2095 = vst [vmem:[%s281 + $0x10] sm:$0xff] %v2079
      %2096 = vst [vmem:[%s281 + $0x18] sm:$0xff] %v2080
      %2097 = vst [vmem:[%s281 + $0x20] sm:$0xff] %v2081
      %2098 = vst [vmem:[%s281 + $0x28] sm:$0xff] %v2082
      %2099 = vst [vmem:[%s281 + $0x30] sm:$0xff] %v2083
      %2100 = vst [vmem:[%s281 + $0x38] sm:$0xff] %v2084
      %2101 = vst [vmem:[%s281 + $0x40] sm:$0xff] %v2085
      %2102 = vst [vmem:[%s281 + $0x48] sm:$0xff] %v2086
      %2103 = vst [vmem:[%s281 + $0x50] sm:$0xff] %v2087
      %2104 = vst [vmem:[%s281 + $0x58] sm:$0xff] %v2088
      %2105 = vst [vmem:[%s281 + $0x60] sm:$0xff] %v2089
      %2106 = vst [vmem:[%s281 + $0x68] sm:$0xff] %v2090
      %2107 = vst [vmem:[%s281 + $0x70] sm:$0xff] %v2091
      %2108 = vst [vmem:[%s281 + $0x78] sm:$0xff] %v2092
      %s2109 = smul.u32 8, %s21
      %p2110 = scmp.lt.s32.totalorder %s20, 1
      %s2111 = scalar_select %p2110, %s20, 1
      %p2112 = scmp.lt.s32.totalorder %s2109, 15
      %s2113 = scalar_select %p2112, %s2109, 15
      %p2114 = scmp.lt.s32.totalorder %s22, 0
      %s2115 = scalar_select %p2114, %s22, 0
      %s2116 = smul.addr %s2113, 2
      %s2117 = sadd.s32 %s2115, %s2116
      %s2118 = smul.addr %s2111, 32
      %s2119 = sadd.s32 %s2117, %s2118
      %s2120 = smul.addr %s2119, 8
      %s2121 = scalar_lea.vmem %s4, %s2120
      // Predicated region
      $region41: #{conv_bn_relu.1} parent=35 // pred_check
        %p2122 = pneg %p160
      $region42: #{conv_bn_relu.1} parent=35 // pred_check_branch
        %2124 = sbr.rel (%p2122) target = $region44
      $region43: #{conv_bn_relu.1} parent=35 // pred_region
        %s2125 = smul.u32 8, %s21
      $region44: #{conv_bn_relu.1} parent=35 // pred_fallthru
        _
    $region36: #{conv_bn_relu.1} parent=5 // pred_fallthru
      _
    %p2126 = scmp.le.s32.totalorder 2, %s10
    // Predicated region
    $region45: #{conv_bn_relu.1} parent=5 // pred_check
      %p2127 = pneg %p2126
    $region46: #{conv_bn_relu.1} parent=5 // pred_check_branch
      %2129 = sbr.rel (%p2127) target = $region48
    $region47: #{conv_bn_relu.1} parent=5 // pred_region
      %s2130 = ssub.s32 %s10, 2
      // Predicated region
      $region49: #{conv_bn_relu.1} parent=47 // pred_check
        %p2131 = pneg %p166
      $region50: #{conv_bn_relu.1} parent=47 // pred_check_branch
        %2133 = sbr.rel (%p2131) target = $region52
      $region51: #{conv_bn_relu.1} parent=47 // pred_region
        %s2134 = smul.u32 8, %s24
        %p2135 = scmp.lt.s32.totalorder %s23, 1
        %s2136 = scalar_select %p2135, %s23, 1
        %p2137 = scmp.lt.s32.totalorder %s2134, 15
        %s2138 = scalar_select %p2137, %s2134, 15
        %p2139 = scmp.lt.s32.totalorder %s25, 0
        %s2140 = scalar_select %p2139, %s25, 0
        %s2141 = smul.addr %s2138, 2
        %s2142 = sadd.s32 %s2140, %s2141
        %s2143 = smul.addr %s2136, 32
        %s2144 = sadd.s32 %s2142, %s2143
        %s2145 = smul.addr %s2144, 8
        %s2146 = scalar_lea.vmem %s4, %s2145
      $region52: #{conv_bn_relu.1} parent=47 // pred_fallthru
        _
    $region48: #{conv_bn_relu.1} parent=5 // pred_fallthru
      _
  $region6: #{conv_bn_relu.1} parent=0 // loop_footer
    %s14 = sadd.s32 1, %s10
  $region7: #{conv_bn_relu.1} parent=0 // loop_footer_branch
    %9 = sbr.rel target = $region3
  $region8: #{conv_bn_relu.1} parent=0 // loop_exit
    _

</llo_original>
